<compile_context>
chip_gen: v6e
topology: v6e:2x2x1
jax: 0.10.0
libtpu: 0.0.40
codegen_flags: <defaults>
</compile_context>

<pallas_src>
import functools

import jax
import jax.numpy as jnp
from jax.experimental import pallas as pl
from jax.experimental.pallas import tpu as pltpu


# --------------------------------------------------------------------------------------
# Kernel
# --------------------------------------------------------------------------------------
def _vib_kernel(x_ref, eps_ref, y_ref,
                w1_ref, b1_ref,
                wh_ref, bh_ref,
                wd1_ref, bd1_ref,
                wd2_ref, bd2_ref,
                zmu_ref, zlv_ref, z_ref, yhat_ref, stats_ref,
                *, latent_dim):
    L = latent_dim
    f32 = jnp.float32
    bf16 = jnp.bfloat16

    x = x_ref[...]                                                     # (TB, D) bf16

    # ---- encoder (bf16 MXU operands, f32 accumulation) ----
    h = jnp.dot(x, w1_ref[...], preferred_element_type=f32) + b1_ref[...]
    h = jnp.maximum(h, 0.0)

    heads = jnp.dot(h.astype(bf16), wh_ref[...],
                    preferred_element_type=f32) + bh_ref[...]          # (TB, 2L)
    z_mu = heads[:, :L]
    z_lv = heads[:, L:]

    # ---- reparametrization: std = exp(lv/2) (one EUP push); var = std*std reused in prior ----
    std = jnp.exp(0.5 * z_lv)
    var = std * std                                                    # == exp(z_lv)
    z = z_mu + eps_ref[...].astype(f32) * std

    # ---- decoder ----
    hd = jnp.dot(z.astype(bf16), wd1_ref[...],
                 preferred_element_type=f32) + bd1_ref[...]
    hd = jnp.maximum(hd, 0.0)
    yhat = jnp.dot(hd.astype(bf16), wd2_ref[...],
                   preferred_element_type=f32) + bd2_ref[...]          # (TB, D)

    # ---- outputs (separate refs; no sub-128-lane concatenation) ----
    zmu_ref[...] = z_mu
    zlv_ref[...] = z_lv
    z_ref[...] = z
    yhat_ref[...] = yhat

    # ---- per-sample losses, written lane-dense with batch on the lane axis: (2, TB) ----
    diff = yhat - y_ref[...]
    prior = -0.5 * jnp.sum(1.0 + z_lv - z_mu * z_mu - var, axis=-1)    # (TB,)
    sqerr = jnp.sum(diff * diff, axis=-1)                              # (TB,)
    stats_ref[0, :] = prior
    stats_ref[1, :] = sqerr


# --------------------------------------------------------------------------------------
# Tiling / VMEM heuristics
# --------------------------------------------------------------------------------------
def _round_up(n, m):
    return ((n + m - 1) // m) * m


def _vmem_cap_bytes():
    # Generation-aware cap: ~3/4 of physical VMEM (v7x: 64 MiB -> 48 MiB; v5e/v6e: 128 -> 96 MiB).
    try:
        cap = int(pltpu.get_tpu_info().vmem_capacity_bytes)
        return (cap * 3) // 4
    except Exception:
        return 48 << 20          # conservative fallback, safe on every generation


def _tile_vmem_bytes(tb, D, H, L):
    bf16b, f32b = 2, 4
    # Pallas double-buffers every operand, including the constant-index weights -> count them 2x.
    weights = 2 * (bf16b * (D * H + H * 2 * L + L * H + H * D)
                   + f32b * (H + 2 * L + H + D))
    tiles_in = bf16b * tb * (D + L) + f32b * tb * D                    # x (bf16), eps (bf16), y
    tiles_out = f32b * (3 * tb * L + tb * D + 2 * tb)                  # z_mu/z_lv/z, yhat, stats
    return weights + 2 * (tiles_in + tiles_out)                        # double-buffered tiles


def _choose_batch_tile(batch, D, H, L, vmem_cap):
    b8 = _round_up(max(batch, 8), 8)
    # Prefer the largest tile that still leaves >= 2 grid steps (megacore sharding on v7x) and
    # fits under the VMEM cap with headroom.  Multi-tile tiles stay >= 128 so the (2, TB) stats
    # block keeps a 128-multiple lane width.
    for tb in (2048, 1024, 512, 256, 128):
        if 2 * tb <= b8 and 4 * _tile_vmem_bytes(tb, D, H, L) <= vmem_cap:
            return tb
    # Small batch: a single 8-aligned tile (grid=(1,) is fine on single-TC chips).
    return b8


def _pad_rows(a, rows):
    if a.shape[0] == rows:
        return a
    return jnp.pad(a, ((0, rows - a.shape[0]), (0, 0)))


# --------------------------------------------------------------------------------------
# Wrapper (full VariationalIB.forward + prior/mse losses)
# --------------------------------------------------------------------------------------
def variational_ib_forward(batch, params, eps, *, tile_b=None):
    """Fused VIB forward (encoder + reparam + decoder + losses), tiled over the batch.
    Returns the augmented batch dict (z_mu, z_log_var, z, Yhat, prior_loss, mse_loss)."""
    f32, bf16 = jnp.float32, jnp.bfloat16

    x = batch["X"].astype(bf16)          # bf16 DMA: halves input traffic, matmul operand anyway
    y = batch["Y"].astype(f32)           # stays f32 for the MSE
    eps_b = eps.astype(bf16)

    B, D = x.shape
    H = params["w1"].shape[1]
    L = params["wmu"].shape[1]

    vmem_cap = _vmem_cap_bytes()
    if tile_b is None:
        tile_b = _choose_batch_tile(B, D, H, L, vmem_cap)
    bp = _round_up(B, tile_b)            # pad batch instead of asserting divisibility
    num_tiles = bp // tile_b

    x = _pad_rows(x, bp)
    y = _pad_rows(y, bp)
    eps_b = _pad_rows(eps_b, bp)

    # Fused encoder head; weight matrices in bf16, biases in f32.
    w1 = params["w1"].astype(bf16)
    wh = jnp.concatenate([params["wmu"], params["wlv"]], axis=-1).astype(bf16)   # (H, 2L)
    bh = jnp.concatenate([params["bmu"], params["blv"]], axis=-1)                # (1, 2L)
    wd1 = params["wd1"].astype(bf16)
    wd2 = params["wd2"].astype(bf16)
    b1, bd1, bd2 = params["b1"], params["bd1"], params["bd2"]

    def batch_spec(d):
        return pl.BlockSpec((tile_b, d), lambda i: (i, 0))

    def const_spec(shape):
        # Weights/biases: constant index_map -> stay resident in VMEM across grid steps.
        return pl.BlockSpec(shape, lambda i: (0,) * len(shape))

    in_specs = [
        batch_spec(D),                  # X (bf16)
        batch_spec(L),                  # eps (bf16)
        batch_spec(D),                  # Y (f32)
        const_spec(w1.shape), const_spec(b1.shape),
        const_spec(wh.shape), const_spec(bh.shape),
        const_spec(wd1.shape), const_spec(bd1.shape),
        const_spec(wd2.shape), const_spec(bd2.shape),
    ]
    out_shape = (
        jax.ShapeDtypeStruct((bp, L), f32),      # z_mu
        jax.ShapeDtypeStruct((bp, L), f32),      # z_log_var
        jax.ShapeDtypeStruct((bp, L), f32),      # z
        jax.ShapeDtypeStruct((bp, D), f32),      # Yhat
        jax.ShapeDtypeStruct((2, bp), f32),      # [prior_loss ; per-sample sq-err], lane-dense
    )
    out_specs = (
        batch_spec(L), batch_spec(L), batch_spec(L), batch_spec(D),
        pl.BlockSpec((2, tile_b), lambda i: (0, i)),
    )

    vmem_limit = int(min(max(4 * _tile_vmem_bytes(tile_b, D, H, L), 16 << 20), vmem_cap))

    z_mu, z_lv, z, yhat, stats = pl.pallas_call(
        functools.partial(_vib_kernel, latent_dim=L),
        grid=(num_tiles,),
        in_specs=in_specs,
        out_specs=out_specs,
        out_shape=out_shape,
        compiler_params=pltpu.CompilerParams(
            dimension_semantics=("parallel",),
            vmem_limit_bytes=vmem_limit,
        ),
    )(x, eps_b, y, w1, b1, wh, bh, wd1, bd1, wd2, bd2)

    out = dict(batch)
    out["z_mu"] = z_mu[:B]
    out["z_log_var"] = z_lv[:B]
    out["z"] = z[:B]
    out["Yhat"] = yhat[:B]
    out["prior_loss"] = stats[0, :B]                     # (B,)
    out["mse_loss"] = jnp.sum(stats[1, :B]) / D          # scalar (cross-tile sum done here)
    return out


# --------------------------------------------------------------------------------------
# Parameters, pure-JAX reference, and self-check
# --------------------------------------------------------------------------------------
def init_params(key, input_dim, hidden_dim, latent_dim):
    ks = jax.random.split(key, 6)
    s = lambda fan_in: 1.0 / jnp.sqrt(float(fan_in))
    return {
        # encoder
        "w1":  jax.random.normal(ks[0], (input_dim, hidden_dim), jnp.float32) * s(input_dim),
        "b1":  jnp.zeros((1, hidden_dim), jnp.float32),
        "wmu": jax.random.normal(ks[1], (hidden_dim, latent_dim), jnp.float32) * s(hidden_dim),
        "bmu": jnp.zeros((1, latent_dim), jnp.float32),
        "wlv": jax.random.normal(ks[2], (hidden_dim, latent_dim), jnp.float32) * s(hidden_dim),
        "blv": jnp.zeros((1, latent_dim), jnp.float32),
        # decoder
        "wd1": jax.random.normal(ks[3], (latent_dim, hidden_dim), jnp.float32) * s(latent_dim),
        "bd1": jnp.zeros((1, hidden_dim), jnp.float32),
        "wd2": jax.random.normal(ks[4], (hidden_dim, input_dim), jnp.float32) * s(hidden_dim),
        "bd2": jnp.zeros((1, input_dim), jnp.float32),
    }


def _reference(batch, params, eps_bf16):
    """Pure-JAX reference with the same bf16-operand / f32-accumulate numerics as the kernel."""
    bf16, f32 = jnp.bfloat16, jnp.float32
    x = batch["X"].astype(bf16)
    y = batch["Y"].astype(f32)
    D = x.shape[1]
    dot = lambda a, w: jnp.dot(a.astype(bf16), w.astype(bf16), preferred_element_type=f32)
    h = jnp.maximum(dot(x, params["w1"]) + params["b1"], 0.0)
    z_mu = dot(h, params["wmu"]) + params["bmu"]
    z_lv = dot(h, params["wlv"]) + params["blv"]
    z = z_mu + eps_bf16.astype(f32) * jnp.exp(z_lv / 2.0)
    hd = jnp.maximum(dot(z, params["wd1"]) + params["bd1"], 0.0)
    yhat = dot(hd, params["wd2"]) + params["bd2"]
    prior = jnp.sum(-0.5 * (1.0 + z_lv - z_mu ** 2 - jnp.exp(z_lv)), axis=-1)
    mse = jnp.sum((yhat - y) ** 2) / D
    return z_mu, z_lv, z, yhat, prior, mse


if __name__ == "__main__":
    B, INPUT_DIM, HIDDEN_DIM, LATENT_DIM = 256, 16, 32, 8   # -> 2 batch tiles of 128

    key = jax.random.PRNGKey(0)
    k_x, k_y, k_eps, k_p = jax.random.split(key, 4)

    batch = {
        "X": jax.random.normal(k_x, (B, INPUT_DIM), jnp.float32),
        "Y": jax.random.normal(k_y, (B, INPUT_DIM), jnp.float32),
    }
    # Reparametrization noise is passed explicitly (deterministic & verifiable); it could
    # alternatively be drawn in-kernel with pltpu.prng_seed / pltpu.stateful_normal.
    eps = jax.random.normal(k_eps, (B, LATENT_DIM), jnp.float32)
    params = init_params(k_p, INPUT_DIM, HIDDEN_DIM, LATENT_DIM)

    out = variational_ib_forward(batch, params, eps)
    jax.block_until_ready(out)

    # verify against the pure-JAX reference (same bf16 eps as the kernel path)
    r_zmu, r_zlv, r_z, r_yhat, r_prior, r_mse = _reference(batch, params, eps.astype(jnp.bfloat16))
    assert jnp.allclose(out["z_mu"], r_zmu, atol=1e-4), "z_mu mismatch"
    assert jnp.allclose(out["z_log_var"], r_zlv, atol=1e-4), "z_log_var mismatch"
    assert jnp.allclose(out["z"], r_z, atol=1e-4), "z mismatch"
    assert jnp.allclose(out["Yhat"], r_yhat, rtol=1e-3, atol=1e-2), "Yhat mismatch"
    assert jnp.allclose(out["prior_loss"], r_prior, atol=1e-4), "prior_loss mismatch"
    assert jnp.allclose(out["mse_loss"], r_mse, rtol=1e-3, atol=1e-2), "mse_loss mismatch"

    print("KERNEL_OK")
</pallas_src>

<mosaic_0001>
module attributes {stable_mosaic.version = 11 : i64} {
  func.func @_vib_kernel(%arg0: i32, %arg1: memref<128x16xbf16, #tpu.memory_space<vmem>>, %arg2: memref<128x8xbf16, #tpu.memory_space<vmem>>, %arg3: memref<128x16xf32, #tpu.memory_space<vmem>>, %arg4: memref<16x32xbf16, #tpu.memory_space<vmem>>, %arg5: memref<1x32xf32, #tpu.memory_space<vmem>>, %arg6: memref<32x16xbf16, #tpu.memory_space<vmem>>, %arg7: memref<1x16xf32, #tpu.memory_space<vmem>>, %arg8: memref<8x32xbf16, #tpu.memory_space<vmem>>, %arg9: memref<1x32xf32, #tpu.memory_space<vmem>>, %arg10: memref<32x16xbf16, #tpu.memory_space<vmem>>, %arg11: memref<1x16xf32, #tpu.memory_space<vmem>>, %arg12: memref<128x8xf32, #tpu.memory_space<vmem>>, %arg13: memref<128x8xf32, #tpu.memory_space<vmem>>, %arg14: memref<128x8xf32, #tpu.memory_space<vmem>>, %arg15: memref<128x16xf32, #tpu.memory_space<vmem>>, %arg16: memref<2x128xf32, #tpu.memory_space<vmem>>) attributes {dimension_semantics = [#tpu.dimension_semantics<parallel>], iteration_bounds = array<i64: 2>, scalar_prefetch = 0 : i64, scratch_operands = 0 : i64, tpu.core_type = #tpu.core_type<tc>, window_params = [{transform_indices = @transform_0, window_bounds = array<i64: 128, 16>}, {transform_indices = @transform_1, window_bounds = array<i64: 128, 8>}, {transform_indices = @transform_2, window_bounds = array<i64: 128, 16>}, {pipeline_mode = #tpu.pipeline_mode<synchronous>, transform_indices = @transform_3, window_bounds = array<i64: 16, 32>}, {pipeline_mode = #tpu.pipeline_mode<synchronous>, transform_indices = @transform_4, window_bounds = array<i64: 1, 32>}, {pipeline_mode = #tpu.pipeline_mode<synchronous>, transform_indices = @transform_5, window_bounds = array<i64: 32, 16>}, {pipeline_mode = #tpu.pipeline_mode<synchronous>, transform_indices = @transform_6, window_bounds = array<i64: 1, 16>}, {pipeline_mode = #tpu.pipeline_mode<synchronous>, transform_indices = @transform_7, window_bounds = array<i64: 8, 32>}, {pipeline_mode = #tpu.pipeline_mode<synchronous>, transform_indices = @transform_8, window_bounds = array<i64: 1, 32>}, {pipeline_mode = #tpu.pipeline_mode<synchronous>, transform_indices = @transform_9, window_bounds = array<i64: 32, 16>}, {pipeline_mode = #tpu.pipeline_mode<synchronous>, transform_indices = @transform_10, window_bounds = array<i64: 1, 16>}, {transform_indices = @transform_11, window_bounds = array<i64: 128, 8>}, {transform_indices = @transform_12, window_bounds = array<i64: 128, 8>}, {transform_indices = @transform_13, window_bounds = array<i64: 128, 8>}, {transform_indices = @transform_14, window_bounds = array<i64: 128, 16>}, {transform_indices = @transform_15, window_bounds = array<i64: 2, 128>}]} {
    %c0 = arith.constant 0 : index
    %c0_0 = arith.constant 0 : index
    %0 = vector.load %arg1[%c0, %c0_0] : memref<128x16xbf16, #tpu.memory_space<vmem>>, vector<128x16xbf16>
    %c0_1 = arith.constant 0 : index
    %c0_2 = arith.constant 0 : index
    %1 = vector.load %arg4[%c0_1, %c0_2] : memref<16x32xbf16, #tpu.memory_space<vmem>>, vector<16x32xbf16>
    %cst = arith.constant dense<0.000000e+00> : vector<128x32xf32>
    %2 = tpu.matmul %0, %1, %cst {dimension_numbers = #tpu.dot_dimension_numbers<[1], [0], [0], [1], [0, 0, 1, 1], [], []>} : vector<128x16xbf16>, vector<16x32xbf16>, vector<128x32xf32> -> vector<128x32xf32>
    %c0_3 = arith.constant 0 : index
    %c0_4 = arith.constant 0 : index
    %3 = vector.load %arg5[%c0_3, %c0_4] : memref<1x32xf32, #tpu.memory_space<vmem>>, vector<1x32xf32>
    %4 = vector.broadcast %3 : vector<1x32xf32> to vector<128x32xf32>
    %5 = arith.addf %2, %4 : vector<128x32xf32>
    %cst_5 = arith.constant 0.000000e+00 : f32
    %6 = vector.broadcast %cst_5 : f32 to vector<128x32xf32>
    %7 = arith.maximumf %5, %6 : vector<128x32xf32>
    %8 = arith.truncf %7 : vector<128x32xf32> to vector<128x32xbf16>
    %c0_6 = arith.constant 0 : index
    %c0_7 = arith.constant 0 : index
    %9 = vector.load %arg6[%c0_6, %c0_7] : memref<32x16xbf16, #tpu.memory_space<vmem>>, vector<32x16xbf16>
    %cst_8 = arith.constant dense<0.000000e+00> : vector<128x16xf32>
    %10 = tpu.matmul %8, %9, %cst_8 {dimension_numbers = #tpu.dot_dimension_numbers<[1], [0], [0], [1], [0, 0, 1, 1], [], []>} : vector<128x32xbf16>, vector<32x16xbf16>, vector<128x16xf32> -> vector<128x16xf32>
    %c0_9 = arith.constant 0 : index
    %c0_10 = arith.constant 0 : index
    %11 = vector.load %arg7[%c0_9, %c0_10] : memref<1x16xf32, #tpu.memory_space<vmem>>, vector<1x16xf32>
    %12 = vector.broadcast %11 : vector<1x16xf32> to vector<128x16xf32>
    %13 = arith.addf %10, %12 : vector<128x16xf32>
    %14 = vector.extract_strided_slice %13 {offsets = [0, 0], sizes = [128, 8], strides = [1, 1]} : vector<128x16xf32> to vector<128x8xf32>
    %15 = vector.extract_strided_slice %13 {offsets = [0, 8], sizes = [128, 8], strides = [1, 1]} : vector<128x16xf32> to vector<128x8xf32>
    %cst_11 = arith.constant 5.000000e-01 : f32
    %16 = vector.broadcast %cst_11 : f32 to vector<128x8xf32>
    %17 = arith.mulf %16, %15 : vector<128x8xf32>
    %18 = math.exp %17 : vector<128x8xf32>
    %19 = arith.mulf %18, %18 : vector<128x8xf32>
    %c0_12 = arith.constant 0 : index
    %c0_13 = arith.constant 0 : index
    %20 = vector.load %arg2[%c0_12, %c0_13] : memref<128x8xbf16, #tpu.memory_space<vmem>>, vector<128x8xbf16>
    %21 = arith.extf %20 : vector<128x8xbf16> to vector<128x8xf32>
    %22 = arith.mulf %21, %18 : vector<128x8xf32>
    %23 = arith.addf %14, %22 : vector<128x8xf32>
    %24 = arith.truncf %23 : vector<128x8xf32> to vector<128x8xbf16>
    %c0_14 = arith.constant 0 : index
    %c0_15 = arith.constant 0 : index
    %25 = vector.load %arg8[%c0_14, %c0_15] : memref<8x32xbf16, #tpu.memory_space<vmem>>, vector<8x32xbf16>
    %cst_16 = arith.constant dense<0.000000e+00> : vector<128x32xf32>
    %26 = tpu.matmul %24, %25, %cst_16 {dimension_numbers = #tpu.dot_dimension_numbers<[1], [0], [0], [1], [0, 0, 1, 1], [], []>} : vector<128x8xbf16>, vector<8x32xbf16>, vector<128x32xf32> -> vector<128x32xf32>
    %c0_17 = arith.constant 0 : index
    %c0_18 = arith.constant 0 : index
    %27 = vector.load %arg9[%c0_17, %c0_18] : memref<1x32xf32, #tpu.memory_space<vmem>>, vector<1x32xf32>
    %28 = vector.broadcast %27 : vector<1x32xf32> to vector<128x32xf32>
    %29 = arith.addf %26, %28 : vector<128x32xf32>
    %cst_19 = arith.constant 0.000000e+00 : f32
    %30 = vector.broadcast %cst_19 : f32 to vector<128x32xf32>
    %31 = arith.maximumf %29, %30 : vector<128x32xf32>
    %32 = arith.truncf %31 : vector<128x32xf32> to vector<128x32xbf16>
    %c0_20 = arith.constant 0 : index
    %c0_21 = arith.constant 0 : index
    %33 = vector.load %arg10[%c0_20, %c0_21] : memref<32x16xbf16, #tpu.memory_space<vmem>>, vector<32x16xbf16>
    %cst_22 = arith.constant dense<0.000000e+00> : vector<128x16xf32>
    %34 = tpu.matmul %32, %33, %cst_22 {dimension_numbers = #tpu.dot_dimension_numbers<[1], [0], [0], [1], [0, 0, 1, 1], [], []>} : vector<128x32xbf16>, vector<32x16xbf16>, vector<128x16xf32> -> vector<128x16xf32>
    %c0_23 = arith.constant 0 : index
    %c0_24 = arith.constant 0 : index
    %35 = vector.load %arg11[%c0_23, %c0_24] : memref<1x16xf32, #tpu.memory_space<vmem>>, vector<1x16xf32>
    %36 = vector.broadcast %35 : vector<1x16xf32> to vector<128x16xf32>
    %37 = arith.addf %34, %36 : vector<128x16xf32>
    %c0_25 = arith.constant 0 : index
    %c0_26 = arith.constant 0 : index
    %38 = vector.load %arg12[%c0_25, %c0_26] : memref<128x8xf32, #tpu.memory_space<vmem>>, vector<128x8xf32>
    tpu.vector_store %arg12[%c0_25, %c0_26], %14 {strides = array<i32>} : memref<128x8xf32, #tpu.memory_space<vmem>>, vector<128x8xf32>,
    %c0_27 = arith.constant 0 : index
    %c0_28 = arith.constant 0 : index
    %39 = vector.load %arg13[%c0_27, %c0_28] : memref<128x8xf32, #tpu.memory_space<vmem>>, vector<128x8xf32>
    tpu.vector_store %arg13[%c0_27, %c0_28], %15 {strides = array<i32>} : memref<128x8xf32, #tpu.memory_space<vmem>>, vector<128x8xf32>,
    %c0_29 = arith.constant 0 : index
    %c0_30 = arith.constant 0 : index
    %40 = vector.load %arg14[%c0_29, %c0_30] : memref<128x8xf32, #tpu.memory_space<vmem>>, vector<128x8xf32>
    tpu.vector_store %arg14[%c0_29, %c0_30], %23 {strides = array<i32>} : memref<128x8xf32, #tpu.memory_space<vmem>>, vector<128x8xf32>,
    %c0_31 = arith.constant 0 : index
    %c0_32 = arith.constant 0 : index
    %41 = vector.load %arg15[%c0_31, %c0_32] : memref<128x16xf32, #tpu.memory_space<vmem>>, vector<128x16xf32>
    tpu.vector_store %arg15[%c0_31, %c0_32], %37 {strides = array<i32>} : memref<128x16xf32, #tpu.memory_space<vmem>>, vector<128x16xf32>,
    %c0_33 = arith.constant 0 : index
    %c0_34 = arith.constant 0 : index
    %42 = vector.load %arg3[%c0_33, %c0_34] : memref<128x16xf32, #tpu.memory_space<vmem>>, vector<128x16xf32>
    %43 = arith.subf %37, %42 : vector<128x16xf32>
    %cst_35 = arith.constant 1.000000e+00 : f32
    %44 = vector.broadcast %cst_35 : f32 to vector<128x8xf32>
    %45 = arith.addf %44, %15 : vector<128x8xf32>
    %46 = arith.mulf %14, %14 : vector<128x8xf32>
    %47 = arith.subf %45, %46 : vector<128x8xf32>
    %48 = arith.subf %47, %19 : vector<128x8xf32>
    %cst_36 = arith.constant dense<0.000000e+00> : vector<128xf32>
    %49 = vector.multi_reduction <add>, %48, %cst_36 [1] : vector<128x8xf32> to vector<128xf32>
    %cst_37 = arith.constant -5.000000e-01 : f32
    %50 = vector.broadcast %cst_37 : f32 to vector<128xf32>
    %51 = arith.mulf %50, %49 : vector<128xf32>
    %52 = arith.mulf %43, %43 : vector<128x16xf32>
    %cst_38 = arith.constant dense<0.000000e+00> : vector<128xf32>
    %53 = vector.multi_reduction <add>, %52, %cst_38 [1] : vector<128x16xf32> to vector<128xf32>
    %c0_39 = arith.constant 0 : index
    %c0_40 = arith.constant 0 : index
    %54 = vector.load %arg16[%c0_39, %c0_40] : memref<2x128xf32, #tpu.memory_space<vmem>>, vector<1x128xf32>
    %55 = vector.shape_cast %54 : vector<1x128xf32> to vector<128xf32>
    %56 = vector.shape_cast %51 : vector<128xf32> to vector<1x128xf32>
    tpu.vector_store %arg16[%c0_39, %c0_40], %56 {strides = array<i32>} : memref<2x128xf32, #tpu.memory_space<vmem>>, vector<1x128xf32>,
    %c1 = arith.constant 1 : index
    %c0_41 = arith.constant 0 : index
    %57 = vector.load %arg16[%c1, %c0_41] : memref<2x128xf32, #tpu.memory_space<vmem>>, vector<1x128xf32>
    %58 = vector.shape_cast %57 : vector<1x128xf32> to vector<128xf32>
    %59 = vector.shape_cast %53 : vector<128xf32> to vector<1x128xf32>
    tpu.vector_store %arg16[%c1, %c0_41], %59 {strides = array<i32>} : memref<2x128xf32, #tpu.memory_space<vmem>>, vector<1x128xf32>,
    return
  }
  func.func @transform_0(%arg0: i32) -> (i32, i32) {
    %c0_i32 = arith.constant 0 : i32
    %c0_i32_0 = arith.constant 0 : i32
    return %arg0, %c0_i32 : i32, i32
  }
  func.func @transform_1(%arg0: i32) -> (i32, i32) {
    %c0_i32 = arith.constant 0 : i32
    %c0_i32_0 = arith.constant 0 : i32
    return %arg0, %c0_i32 : i32, i32
  }
  func.func @transform_2(%arg0: i32) -> (i32, i32) {
    %c0_i32 = arith.constant 0 : i32
    %c0_i32_0 = arith.constant 0 : i32
    return %arg0, %c0_i32 : i32, i32
  }
  func.func @transform_3(%arg0: i32) -> (i32, i32) {
    %c0_i32 = arith.constant 0 : i32
    %c0_i32_0 = arith.constant 0 : i32
    %c0_i32_1 = arith.constant 0 : i32
    return %c0_i32, %c0_i32_0 : i32, i32
  }
  func.func @transform_4(%arg0: i32) -> (i32, i32) {
    %c0_i32 = arith.constant 0 : i32
    %c0_i32_0 = arith.constant 0 : i32
    %c0_i32_1 = arith.constant 0 : i32
    return %c0_i32, %c0_i32_0 : i32, i32
  }
  func.func @transform_5(%arg0: i32) -> (i32, i32) {
    %c0_i32 = arith.constant 0 : i32
    %c0_i32_0 = arith.constant 0 : i32
    %c0_i32_1 = arith.constant 0 : i32
    return %c0_i32, %c0_i32_0 : i32, i32
  }
  func.func @transform_6(%arg0: i32) -> (i32, i32) {
    %c0_i32 = arith.constant 0 : i32
    %c0_i32_0 = arith.constant 0 : i32
    %c0_i32_1 = arith.constant 0 : i32
    return %c0_i32, %c0_i32_0 : i32, i32
  }
  func.func @transform_7(%arg0: i32) -> (i32, i32) {
    %c0_i32 = arith.constant 0 : i32
    %c0_i32_0 = arith.constant 0 : i32
    %c0_i32_1 = arith.constant 0 : i32
    return %c0_i32, %c0_i32_0 : i32, i32
  }
  func.func @transform_8(%arg0: i32) -> (i32, i32) {
    %c0_i32 = arith.constant 0 : i32
    %c0_i32_0 = arith.constant 0 : i32
    %c0_i32_1 = arith.constant 0 : i32
    return %c0_i32, %c0_i32_0 : i32, i32
  }
  func.func @transform_9(%arg0: i32) -> (i32, i32) {
    %c0_i32 = arith.constant 0 : i32
    %c0_i32_0 = arith.constant 0 : i32
    %c0_i32_1 = arith.constant 0 : i32
    return %c0_i32, %c0_i32_0 : i32, i32
  }
  func.func @transform_10(%arg0: i32) -> (i32, i32) {
    %c0_i32 = arith.constant 0 : i32
    %c0_i32_0 = arith.constant 0 : i32
    %c0_i32_1 = arith.constant 0 : i32
    return %c0_i32, %c0_i32_0 : i32, i32
  }
  func.func @transform_11(%arg0: i32) -> (i32, i32) {
    %c0_i32 = arith.constant 0 : i32
    %c0_i32_0 = arith.constant 0 : i32
    return %arg0, %c0_i32 : i32, i32
  }
  func.func @transform_12(%arg0: i32) -> (i32, i32) {
    %c0_i32 = arith.constant 0 : i32
    %c0_i32_0 = arith.constant 0 : i32
    return %arg0, %c0_i32 : i32, i32
  }
  func.func @transform_13(%arg0: i32) -> (i32, i32) {
    %c0_i32 = arith.constant 0 : i32
    %c0_i32_0 = arith.constant 0 : i32
    return %arg0, %c0_i32 : i32, i32
  }
  func.func @transform_14(%arg0: i32) -> (i32, i32) {
    %c0_i32 = arith.constant 0 : i32
    %c0_i32_0 = arith.constant 0 : i32
    return %arg0, %c0_i32 : i32, i32
  }
  func.func @transform_15(%arg0: i32) -> (i32, i32) {
    %c0_i32 = arith.constant 0 : i32
    %c0_i32_0 = arith.constant 0 : i32
    return %c0_i32, %arg0 : i32, i32
  }
}

</mosaic_0001>

<llo_original>
// kernel: tpu_custom_call.1
$region0: #{tpu_custom_call.1}
  #allocation0 [shape = 'u32[]', space=smem, size = 0x4, offset = 0x4, fixed_abs, tag = 'smem constant byte address 0x4 - core index']
  #allocation1 [shape = 'u32[144,128]{1,0:T(1,128)}', space=vmem, size = 0x12000, scoped, tag = 'internal scratch']
  %s0 = inlined_call_operand.vmem [shape: bf16[256,16], index: 0, kind: input, shape index: {}]
  %s1 = inlined_call_operand.vmem [shape: bf16[256,8], index: 1, kind: input, shape index: {}]
  %s2 = inlined_call_operand.vmem [shape: f32[256,16], index: 2, kind: input, shape index: {}]
  %s3 = inlined_call_operand.vmem [shape: bf16[16,32], index: 3, kind: input, shape index: {}]
  %s4 = inlined_call_operand.vmem [shape: f32[1,32], index: 4, kind: input, shape index: {}]
  %s5 = inlined_call_operand.vmem [shape: bf16[32,16], index: 5, kind: input, shape index: {}]
  %s6 = inlined_call_operand.vmem [shape: f32[1,16], index: 6, kind: input, shape index: {}]
  %s7 = inlined_call_operand.vmem [shape: bf16[8,32], index: 7, kind: input, shape index: {}]
  %s8 = inlined_call_operand.vmem [shape: f32[1,32], index: 8, kind: input, shape index: {}]
  %s9 = inlined_call_operand.vmem [shape: bf16[32,16], index: 9, kind: input, shape index: {}]
  %s10 = inlined_call_operand.vmem [shape: f32[1,16], index: 10, kind: input, shape index: {}]
  %s11 = inlined_call_operand.vmem [shape: f32[256,8], index: 11, kind: output, shape index: {0}]
  %s12 = inlined_call_operand.vmem [shape: f32[256,8], index: 12, kind: output, shape index: {1}]
  %s13 = inlined_call_operand.vmem [shape: f32[256,8], index: 13, kind: output, shape index: {2}]
  %s14 = inlined_call_operand.vmem [shape: f32[256,16], index: 14, kind: output, shape index: {3}]
  %s15 = inlined_call_operand.hbm [shape: f32[2,256], index: 15, kind: output, shape index: {4}]
  %16 = xla_tuple %s11, %s12, %s13, %s14, %s15
  %s17 = sld [smem:[#allocation0]]
  $region109: #{tpu_custom_call.1} parent=0
    _
  %s19 = ssub.s32 1, %s17
  %s20 = scalar_select 0, %s19, %s17
  $region1: #{tpu_custom_call.1} parent=0
    #allocation2 [shape = 'u8[2048]{0}', space=vmem, size = 0x800, scoped, tag = 'output window, operand 4']
    #allocation3 [shape = 's32[2]{0}', space=sflag, size = 0x8, scoped, tag = 'scoped memory for tpu_custom_call.1']
    %21 = vsyncpa [#allocation3], 0
    %s22 = scalar_lea.sflag [#allocation3], 1
    %23 = vsyncpa %s22, 0
    loop: start=0, step=1, limit=4
    $region2: #{tpu_custom_call.1} parent=1 // loop_pre_header
      _
    $region3: #{tpu_custom_call.1} parent=1 // loop_header
      %s25 = sphi 0, %s29
      %p26 = scmp.ge.s32.totalorder %s25, 4
      %s35 = sphi 0, %s37
      %s38 = sphi 0, %s35
      %s39 = sphi 0, %s38
      %s55 = sphi 0, %s39
      %s61 = sphi 0, %s63
      %s64 = sphi 0, %s61
      %s65 = sphi 0, %s64
      %s81 = sphi 0, %s65
      %s87 = sphi 0, %s89
      %s90 = sphi 0, %s87
      %s91 = sphi 0, %s90
      %s107 = sphi 0, %s91
      %s111 = sphi 0, %s111
      %s113 = sphi 0, %s111
      %s114 = sphi 0, %s113
      %s128 = sphi 0, %s114
      %s132 = sphi 0, %s132
      %s134 = sphi 0, %s132
      %s135 = sphi 0, %s134
      %s149 = sphi 0, %s135
      %s153 = sphi 0, %s153
      %s155 = sphi 0, %s153
      %s156 = sphi 0, %s155
      %s170 = sphi 0, %s156
      %s174 = sphi 0, %s174
      %s176 = sphi 0, %s174
      %s177 = sphi 0, %s176
      %s191 = sphi 0, %s177
      %s195 = sphi 0, %s195
      %s197 = sphi 0, %s195
      %s198 = sphi 0, %s197
      %s212 = sphi 0, %s198
      %s216 = sphi 0, %s216
      %s218 = sphi 0, %s216
      %s219 = sphi 0, %s218
      %s233 = sphi 0, %s219
      %s237 = sphi 0, %s237
      %s239 = sphi 0, %s237
      %s240 = sphi 0, %s239
      %s254 = sphi 0, %s240
      %s258 = sphi 0, %s258
      %s260 = sphi 0, %s258
      %s261 = sphi 0, %s260
      %s275 = sphi 0, %s261
      %s281 = sphi 0, %s283
      %s284 = sphi 0, %s281
      %s285 = sphi 0, %s284
      %s301 = sphi 0, %s285
      %s307 = sphi 0, %s309
      %s310 = sphi 0, %s307
      %s311 = sphi 0, %s310
      %s327 = sphi 0, %s311
      %s333 = sphi 0, %s335
      %s336 = sphi 0, %s333
      %s337 = sphi 0, %s336
      %s353 = sphi 0, %s337
      %s359 = sphi 0, %s361
      %s362 = sphi 0, %s359
      %s363 = sphi 0, %s362
      %s379 = sphi 0, %s363
      %s385 = sphi 0, %s387
      %s388 = sphi 0, %s385
      %s389 = sphi 0, %s388
      %s405 = sphi 0, %s389
    $region4: #{tpu_custom_call.1} parent=1 // loop_header_branch
      %28 = sbr.rel (%p26) target = $region8
    $region5: #{tpu_custom_call.1} parent=1 // loop_body
      %s30 = ssub.s32 %s25, 1
      %s31 = ssub.s32 %s25, 2
      %s32 = sadd.s32 %s25, 1
      %s33 = ssub.s32 %s25, %s32
      %p34 = scmp.eq.s32.totalorder %s33, 0
      %s36 = sadd.s32 %s35, 1
      %s37 = scalar_select %p34, %s35, %s36
      %p40 = pneg %p34
      %p41 = scmp.eq.s32.totalorder %s25, 1
      %p42 = por %p40, %p41
      %p43 = scmp.ne.s32.totalorder %s35, %s38
      %p44 = scmp.eq.s32.totalorder %s25, 0
      %p45 = por %p43, %p44
      %p46 = scmp.ne.s32.totalorder %s35, %s38
      %p47 = scmp.eq.s32.totalorder %s30, 1
      %p48 = por %p46, %p47
      %p49 = scmp.ne.s32.totalorder %s38, %s39
      %p50 = scmp.eq.s32.totalorder %s30, 0
      %p51 = por %p49, %p50
      %p52 = scmp.ne.s32.totalorder %s38, %s39
      %p53 = scmp.eq.s32.totalorder %s31, 1
      %p54 = por %p52, %p53
      %p56 = scmp.ne.s32.totalorder %s39, %s55
      %p57 = scmp.eq.s32.totalorder %s31, 0
      %p58 = por %p56, %p57
      %s59 = ssub.s32 %s25, %s32
      %p60 = scmp.eq.s32.totalorder %s59, 0
      %s62 = sadd.s32 %s61, 1
      %s63 = scalar_select %p60, %s61, %s62
      %p66 = pneg %p60
      %p67 = scmp.eq.s32.totalorder %s25, 1
      %p68 = por %p66, %p67
      %p69 = scmp.ne.s32.totalorder %s61, %s64
      %p70 = scmp.eq.s32.totalorder %s25, 0
      %p71 = por %p69, %p70
      %p72 = scmp.ne.s32.totalorder %s61, %s64
      %p73 = scmp.eq.s32.totalorder %s30, 1
      %p74 = por %p72, %p73
      %p75 = scmp.ne.s32.totalorder %s64, %s65
      %p76 = scmp.eq.s32.totalorder %s30, 0
      %p77 = por %p75, %p76
      %p78 = scmp.ne.s32.totalorder %s64, %s65
      %p79 = scmp.eq.s32.totalorder %s31, 1
      %p80 = por %p78, %p79
      %p82 = scmp.ne.s32.totalorder %s65, %s81
      %p83 = scmp.eq.s32.totalorder %s31, 0
      %p84 = por %p82, %p83
      %s85 = ssub.s32 %s25, %s32
      %p86 = scmp.eq.s32.totalorder %s85, 0
      %s88 = sadd.s32 %s87, 1
      %s89 = scalar_select %p86, %s87, %s88
      %p92 = pneg %p86
      %p93 = scmp.eq.s32.totalorder %s25, 1
      %p94 = por %p92, %p93
      %p95 = scmp.ne.s32.totalorder %s87, %s90
      %p96 = scmp.eq.s32.totalorder %s25, 0
      %p97 = por %p95, %p96
      %p98 = scmp.ne.s32.totalorder %s87, %s90
      %p99 = scmp.eq.s32.totalorder %s30, 1
      %p100 = por %p98, %p99
      %p101 = scmp.ne.s32.totalorder %s90, %s91
      %p102 = scmp.eq.s32.totalorder %s30, 0
      %p103 = por %p101, %p102
      %p104 = scmp.ne.s32.totalorder %s90, %s91
      %p105 = scmp.eq.s32.totalorder %s31, 1
      %p106 = por %p104, %p105
      %p108 = scmp.ne.s32.totalorder %s91, %s107
      %p109 = scmp.eq.s32.totalorder %s31, 0
      %p110 = por %p108, %p109
      %s112 = sadd.s32 %s111, 1
      %p115 = scmp.eq.s32.totalorder %s25, 1
      %p116 = scmp.ne.s32.totalorder %s111, %s113
      %p117 = scmp.eq.s32.totalorder %s25, 0
      %p118 = por %p116, %p117
      %p119 = scmp.ne.s32.totalorder %s111, %s113
      %p120 = scmp.eq.s32.totalorder %s30, 1
      %p121 = por %p119, %p120
      %p122 = scmp.ne.s32.totalorder %s113, %s114
      %p123 = scmp.eq.s32.totalorder %s30, 0
      %p124 = por %p122, %p123
      %p125 = scmp.ne.s32.totalorder %s113, %s114
      %p126 = scmp.eq.s32.totalorder %s31, 1
      %p127 = por %p125, %p126
      %p129 = scmp.ne.s32.totalorder %s114, %s128
      %p130 = scmp.eq.s32.totalorder %s31, 0
      %p131 = por %p129, %p130
      %s133 = sadd.s32 %s132, 1
      %p136 = scmp.eq.s32.totalorder %s25, 1
      %p137 = scmp.ne.s32.totalorder %s132, %s134
      %p138 = scmp.eq.s32.totalorder %s25, 0
      %p139 = por %p137, %p138
      %p140 = scmp.ne.s32.totalorder %s132, %s134
      %p141 = scmp.eq.s32.totalorder %s30, 1
      %p142 = por %p140, %p141
      %p143 = scmp.ne.s32.totalorder %s134, %s135
      %p144 = scmp.eq.s32.totalorder %s30, 0
      %p145 = por %p143, %p144
      %p146 = scmp.ne.s32.totalorder %s134, %s135
      %p147 = scmp.eq.s32.totalorder %s31, 1
      %p148 = por %p146, %p147
      %p150 = scmp.ne.s32.totalorder %s135, %s149
      %p151 = scmp.eq.s32.totalorder %s31, 0
      %p152 = por %p150, %p151
      %s154 = sadd.s32 %s153, 1
      %p157 = scmp.eq.s32.totalorder %s25, 1
      %p158 = scmp.ne.s32.totalorder %s153, %s155
      %p159 = scmp.eq.s32.totalorder %s25, 0
      %p160 = por %p158, %p159
      %p161 = scmp.ne.s32.totalorder %s153, %s155
      %p162 = scmp.eq.s32.totalorder %s30, 1
      %p163 = por %p161, %p162
      %p164 = scmp.ne.s32.totalorder %s155, %s156
      %p165 = scmp.eq.s32.totalorder %s30, 0
      %p166 = por %p164, %p165
      %p167 = scmp.ne.s32.totalorder %s155, %s156
      %p168 = scmp.eq.s32.totalorder %s31, 1
      %p169 = por %p167, %p168
      %p171 = scmp.ne.s32.totalorder %s156, %s170
      %p172 = scmp.eq.s32.totalorder %s31, 0
      %p173 = por %p171, %p172
      %s175 = sadd.s32 %s174, 1
      %p178 = scmp.eq.s32.totalorder %s25, 1
      %p179 = scmp.ne.s32.totalorder %s174, %s176
      %p180 = scmp.eq.s32.totalorder %s25, 0
      %p181 = por %p179, %p180
      %p182 = scmp.ne.s32.totalorder %s174, %s176
      %p183 = scmp.eq.s32.totalorder %s30, 1
      %p184 = por %p182, %p183
      %p185 = scmp.ne.s32.totalorder %s176, %s177
      %p186 = scmp.eq.s32.totalorder %s30, 0
      %p187 = por %p185, %p186
      %p188 = scmp.ne.s32.totalorder %s176, %s177
      %p189 = scmp.eq.s32.totalorder %s31, 1
      %p190 = por %p188, %p189
      %p192 = scmp.ne.s32.totalorder %s177, %s191
      %p193 = scmp.eq.s32.totalorder %s31, 0
      %p194 = por %p192, %p193
      %s196 = sadd.s32 %s195, 1
      %p199 = scmp.eq.s32.totalorder %s25, 1
      %p200 = scmp.ne.s32.totalorder %s195, %s197
      %p201 = scmp.eq.s32.totalorder %s25, 0
      %p202 = por %p200, %p201
      %p203 = scmp.ne.s32.totalorder %s195, %s197
      %p204 = scmp.eq.s32.totalorder %s30, 1
      %p205 = por %p203, %p204
      %p206 = scmp.ne.s32.totalorder %s197, %s198
      %p207 = scmp.eq.s32.totalorder %s30, 0
      %p208 = por %p206, %p207
      %p209 = scmp.ne.s32.totalorder %s197, %s198
      %p210 = scmp.eq.s32.totalorder %s31, 1
      %p211 = por %p209, %p210
      %p213 = scmp.ne.s32.totalorder %s198, %s212
      %p214 = scmp.eq.s32.totalorder %s31, 0
      %p215 = por %p213, %p214
      %s217 = sadd.s32 %s216, 1
      %p220 = scmp.eq.s32.totalorder %s25, 1
      %p221 = scmp.ne.s32.totalorder %s216, %s218
      %p222 = scmp.eq.s32.totalorder %s25, 0
      %p223 = por %p221, %p222
      %p224 = scmp.ne.s32.totalorder %s216, %s218
      %p225 = scmp.eq.s32.totalorder %s30, 1
      %p226 = por %p224, %p225
      %p227 = scmp.ne.s32.totalorder %s218, %s219
      %p228 = scmp.eq.s32.totalorder %s30, 0
      %p229 = por %p227, %p228
      %p230 = scmp.ne.s32.totalorder %s218, %s219
      %p231 = scmp.eq.s32.totalorder %s31, 1
      %p232 = por %p230, %p231
      %p234 = scmp.ne.s32.totalorder %s219, %s233
      %p235 = scmp.eq.s32.totalorder %s31, 0
      %p236 = por %p234, %p235
      %s238 = sadd.s32 %s237, 1
      %p241 = scmp.eq.s32.totalorder %s25, 1
      %p242 = scmp.ne.s32.totalorder %s237, %s239
      %p243 = scmp.eq.s32.totalorder %s25, 0
      %p244 = por %p242, %p243
      %p245 = scmp.ne.s32.totalorder %s237, %s239
      %p246 = scmp.eq.s32.totalorder %s30, 1
      %p247 = por %p245, %p246
      %p248 = scmp.ne.s32.totalorder %s239, %s240
      %p249 = scmp.eq.s32.totalorder %s30, 0
      %p250 = por %p248, %p249
      %p251 = scmp.ne.s32.totalorder %s239, %s240
      %p252 = scmp.eq.s32.totalorder %s31, 1
      %p253 = por %p251, %p252
      %p255 = scmp.ne.s32.totalorder %s240, %s254
      %p256 = scmp.eq.s32.totalorder %s31, 0
      %p257 = por %p255, %p256
      %s259 = sadd.s32 %s258, 1
      %p262 = scmp.eq.s32.totalorder %s25, 1
      %p263 = scmp.ne.s32.totalorder %s258, %s260
      %p264 = scmp.eq.s32.totalorder %s25, 0
      %p265 = por %p263, %p264
      %p266 = scmp.ne.s32.totalorder %s258, %s260
      %p267 = scmp.eq.s32.totalorder %s30, 1
      %p268 = por %p266, %p267
      %p269 = scmp.ne.s32.totalorder %s260, %s261
      %p270 = scmp.eq.s32.totalorder %s30, 0
      %p271 = por %p269, %p270
      %p272 = scmp.ne.s32.totalorder %s260, %s261
      %p273 = scmp.eq.s32.totalorder %s31, 1
      %p274 = por %p272, %p273
      %p276 = scmp.ne.s32.totalorder %s261, %s275
      %p277 = scmp.eq.s32.totalorder %s31, 0
      %p278 = por %p276, %p277
      %s279 = ssub.s32 %s25, %s32
      %p280 = scmp.eq.s32.totalorder %s279, 0
      %s282 = sadd.s32 %s281, 1
      %s283 = scalar_select %p280, %s281, %s282
      %p286 = pneg %p280
      %p287 = scmp.eq.s32.totalorder %s25, 1
      %p288 = por %p286, %p287
      %p289 = scmp.ne.s32.totalorder %s281, %s284
      %p290 = scmp.eq.s32.totalorder %s25, 0
      %p291 = por %p289, %p290
      %p292 = scmp.ne.s32.totalorder %s281, %s284
      %p293 = scmp.eq.s32.totalorder %s30, 1
      %p294 = por %p292, %p293
      %p295 = scmp.ne.s32.totalorder %s284, %s285
      %p296 = scmp.eq.s32.totalorder %s30, 0
      %p297 = por %p295, %p296
      %p298 = scmp.ne.s32.totalorder %s284, %s285
      %p299 = scmp.eq.s32.totalorder %s31, 1
      %p300 = por %p298, %p299
      %p302 = scmp.ne.s32.totalorder %s285, %s301
      %p303 = scmp.eq.s32.totalorder %s31, 0
      %p304 = por %p302, %p303
      %s305 = ssub.s32 %s25, %s32
      %p306 = scmp.eq.s32.totalorder %s305, 0
      %s308 = sadd.s32 %s307, 1
      %s309 = scalar_select %p306, %s307, %s308
      %p312 = pneg %p306
      %p313 = scmp.eq.s32.totalorder %s25, 1
      %p314 = por %p312, %p313
      %p315 = scmp.ne.s32.totalorder %s307, %s310
      %p316 = scmp.eq.s32.totalorder %s25, 0
      %p317 = por %p315, %p316
      %p318 = scmp.ne.s32.totalorder %s307, %s310
      %p319 = scmp.eq.s32.totalorder %s30, 1
      %p320 = por %p318, %p319
      %p321 = scmp.ne.s32.totalorder %s310, %s311
      %p322 = scmp.eq.s32.totalorder %s30, 0
      %p323 = por %p321, %p322
      %p324 = scmp.ne.s32.totalorder %s310, %s311
      %p325 = scmp.eq.s32.totalorder %s31, 1
      %p326 = por %p324, %p325
      %p328 = scmp.ne.s32.totalorder %s311, %s327
      %p329 = scmp.eq.s32.totalorder %s31, 0
      %p330 = por %p328, %p329
      %s331 = ssub.s32 %s25, %s32
      %p332 = scmp.eq.s32.totalorder %s331, 0
      %s334 = sadd.s32 %s333, 1
      %s335 = scalar_select %p332, %s333, %s334
      %p338 = pneg %p332
      %p339 = scmp.eq.s32.totalorder %s25, 1
      %p340 = por %p338, %p339
      %p341 = scmp.ne.s32.totalorder %s333, %s336
      %p342 = scmp.eq.s32.totalorder %s25, 0
      %p343 = por %p341, %p342
      %p344 = scmp.ne.s32.totalorder %s333, %s336
      %p345 = scmp.eq.s32.totalorder %s30, 1
      %p346 = por %p344, %p345
      %p347 = scmp.ne.s32.totalorder %s336, %s337
      %p348 = scmp.eq.s32.totalorder %s30, 0
      %p349 = por %p347, %p348
      %p350 = scmp.ne.s32.totalorder %s336, %s337
      %p351 = scmp.eq.s32.totalorder %s31, 1
      %p352 = por %p350, %p351
      %p354 = scmp.ne.s32.totalorder %s337, %s353
      %p355 = scmp.eq.s32.totalorder %s31, 0
      %p356 = por %p354, %p355
      %s357 = ssub.s32 %s25, %s32
      %p358 = scmp.eq.s32.totalorder %s357, 0
      %s360 = sadd.s32 %s359, 1
      %s361 = scalar_select %p358, %s359, %s360
      %p364 = pneg %p358
      %p365 = scmp.eq.s32.totalorder %s25, 1
      %p366 = por %p364, %p365
      %p367 = scmp.ne.s32.totalorder %s359, %s362
      %p368 = scmp.eq.s32.totalorder %s25, 0
      %p369 = por %p367, %p368
      %p370 = scmp.ne.s32.totalorder %s359, %s362
      %p371 = scmp.eq.s32.totalorder %s30, 1
      %p372 = por %p370, %p371
      %p373 = scmp.ne.s32.totalorder %s362, %s363
      %p374 = scmp.eq.s32.totalorder %s30, 0
      %p375 = por %p373, %p374
      %p376 = scmp.ne.s32.totalorder %s362, %s363
      %p377 = scmp.eq.s32.totalorder %s31, 1
      %p378 = por %p376, %p377
      %p380 = scmp.ne.s32.totalorder %s363, %s379
      %p381 = scmp.eq.s32.totalorder %s31, 0
      %p382 = por %p380, %p381
      %s383 = ssub.s32 %s25, %s32
      %p384 = scmp.eq.s32.totalorder %s383, 0
      %s386 = sadd.s32 %s385, 1
      %s387 = scalar_select %p384, %s385, %s386
      %p390 = pneg %p384
      %p391 = scmp.eq.s32.totalorder %s25, 1
      %p392 = por %p390, %p391
      %p393 = scmp.ne.s32.totalorder %s385, %s388
      %p394 = scmp.eq.s32.totalorder %s25, 0
      %p395 = por %p393, %p394
      %p396 = scmp.ne.s32.totalorder %s385, %s388
      %p397 = scmp.eq.s32.totalorder %s30, 1
      %p398 = por %p396, %p397
      %p399 = scmp.ne.s32.totalorder %s388, %s389
      %p400 = scmp.eq.s32.totalorder %s30, 0
      %p401 = por %p399, %p400
      %p402 = scmp.ne.s32.totalorder %s388, %s389
      %p403 = scmp.eq.s32.totalorder %s31, 1
      %p404 = por %p402, %p403
      %p406 = scmp.ne.s32.totalorder %s389, %s405
      %p407 = scmp.eq.s32.totalorder %s31, 0
      %p408 = por %p406, %p407
      %p409 = scmp.le.s32.totalorder 1, %s25
      %p410 = scmp.lt.s32.totalorder %s25, 3
      %p411 = pnand %p409, %p410
      %p412 = pneg %p411
      // Predicated region
      $region9: #{tpu_custom_call.1} parent=5 // pred_check
        _
      $region10: #{tpu_custom_call.1} parent=5 // pred_check_branch
        %414 = sbr.rel (%p411) target = $region12
      $region11: #{tpu_custom_call.1} parent=5 // pred_region
        %s415 = ssub.s32 %s25, 1
        // Predicated region
        $region13: #{tpu_custom_call.1} parent=11 // pred_check
          %p416 = pneg %p124
        $region14: #{tpu_custom_call.1} parent=11 // pred_check_branch
          %418 = sbr.rel (%p416) target = $region16
        $region15: #{tpu_custom_call.1} parent=11 // pred_region
          _
        $region16: #{tpu_custom_call.1} parent=11 // pred_fallthru
          _
        // Predicated region
        $region17: #{tpu_custom_call.1} parent=11 // pred_check
          %p419 = pneg %p145
        $region18: #{tpu_custom_call.1} parent=11 // pred_check_branch
          %421 = sbr.rel (%p419) target = $region20
        $region19: #{tpu_custom_call.1} parent=11 // pred_region
          _
        $region20: #{tpu_custom_call.1} parent=11 // pred_fallthru
          _
        // Predicated region
        $region21: #{tpu_custom_call.1} parent=11 // pred_check
          %p422 = pneg %p166
        $region22: #{tpu_custom_call.1} parent=11 // pred_check_branch
          %424 = sbr.rel (%p422) target = $region24
        $region23: #{tpu_custom_call.1} parent=11 // pred_region
          _
        $region24: #{tpu_custom_call.1} parent=11 // pred_fallthru
          _
        // Predicated region
        $region25: #{tpu_custom_call.1} parent=11 // pred_check
          %p425 = pneg %p187
        $region26: #{tpu_custom_call.1} parent=11 // pred_check_branch
          %427 = sbr.rel (%p425) target = $region28
        $region27: #{tpu_custom_call.1} parent=11 // pred_region
          _
        $region28: #{tpu_custom_call.1} parent=11 // pred_fallthru
          _
        // Predicated region
        $region29: #{tpu_custom_call.1} parent=11 // pred_check
          %p428 = pneg %p208
        $region30: #{tpu_custom_call.1} parent=11 // pred_check_branch
          %430 = sbr.rel (%p428) target = $region32
        $region31: #{tpu_custom_call.1} parent=11 // pred_region
          _
        $region32: #{tpu_custom_call.1} parent=11 // pred_fallthru
          _
        // Predicated region
        $region33: #{tpu_custom_call.1} parent=11 // pred_check
          %p431 = pneg %p229
        $region34: #{tpu_custom_call.1} parent=11 // pred_check_branch
          %433 = sbr.rel (%p431) target = $region36
        $region35: #{tpu_custom_call.1} parent=11 // pred_region
          _
        $region36: #{tpu_custom_call.1} parent=11 // pred_fallthru
          _
        // Predicated region
        $region37: #{tpu_custom_call.1} parent=11 // pred_check
          %p434 = pneg %p250
        $region38: #{tpu_custom_call.1} parent=11 // pred_check_branch
          %436 = sbr.rel (%p434) target = $region40
        $region39: #{tpu_custom_call.1} parent=11 // pred_region
          _
        $region40: #{tpu_custom_call.1} parent=11 // pred_fallthru
          _
        // Predicated region
        $region41: #{tpu_custom_call.1} parent=11 // pred_check
          %p437 = pneg %p271
        $region42: #{tpu_custom_call.1} parent=11 // pred_check_branch
          %439 = sbr.rel (%p437) target = $region44
        $region43: #{tpu_custom_call.1} parent=11 // pred_region
          _
        $region44: #{tpu_custom_call.1} parent=11 // pred_fallthru
          _
      $region12: #{tpu_custom_call.1} parent=5 // pred_fallthru
        _
      %p440 = scmp.lt.s32.totalorder %s25, 2
      // Predicated region
      $region45: #{tpu_custom_call.1} parent=5 // pred_check
        %p441 = pneg %p440
      $region46: #{tpu_custom_call.1} parent=5 // pred_check_branch
        %443 = sbr.rel (%p441) target = $region48
      $region47: #{tpu_custom_call.1} parent=5 // pred_region
        // Predicated region
        $region49: #{tpu_custom_call.1} parent=47 // pred_check
          %p444 = pneg %p45
        $region50: #{tpu_custom_call.1} parent=47 // pred_check_branch
          %446 = sbr.rel (%p444) target = $region52
        $region51: #{tpu_custom_call.1} parent=47 // pred_region
          %s447 = smul.u32 16, %s25
          %p448 = scmp.lt.s32.totalorder %s447, 31
          %s449 = scalar_select %p448, %s447, 31
          %s450 = smul.addr %s449, 4
          %s451 = scalar_lea.vmem %s0, %s450
          %s452 = smul.u32 16, %s25
        $region52: #{tpu_custom_call.1} parent=47 // pred_fallthru
          _
        // Predicated region
        $region53: #{tpu_custom_call.1} parent=47 // pred_check
          %p453 = pneg %p71
        $region54: #{tpu_custom_call.1} parent=47 // pred_check_branch
          %455 = sbr.rel (%p453) target = $region56
        $region55: #{tpu_custom_call.1} parent=47 // pred_region
          %s456 = smul.u32 16, %s25
          %p457 = scmp.lt.s32.totalorder %s456, 31
          %s458 = scalar_select %p457, %s456, 31
          %s459 = smul.addr %s458, 4
          %s460 = scalar_lea.vmem %s1, %s459
          %s461 = smul.u32 16, %s25
        $region56: #{tpu_custom_call.1} parent=47 // pred_fallthru
          _
        // Predicated region
        $region57: #{tpu_custom_call.1} parent=47 // pred_check
          %p462 = pneg %p97
        $region58: #{tpu_custom_call.1} parent=47 // pred_check_branch
          %464 = sbr.rel (%p462) target = $region60
        $region59: #{tpu_custom_call.1} parent=47 // pred_region
          %s465 = smul.u32 16, %s25
          %p466 = scmp.lt.s32.totalorder %s465, 31
          %s467 = scalar_select %p466, %s465, 31
          %s468 = smul.addr %s467, 8
          %s469 = scalar_lea.vmem %s2, %s468
          %s470 = smul.u32 16, %s25
        $region60: #{tpu_custom_call.1} parent=47 // pred_fallthru
          _
      $region48: #{tpu_custom_call.1} parent=5 // pred_fallthru
        _
      %p471 = scmp.le.s32.totalorder 1, %s25
      %p472 = scmp.lt.s32.totalorder %s25, 3
      %p473 = pnand %p471, %p472
      %p474 = pneg %p473
      // Predicated region
      $region61: #{tpu_custom_call.1} parent=5 // pred_check
        _
      $region62: #{tpu_custom_call.1} parent=5 // pred_check_branch
        %476 = sbr.rel (%p473) target = $region64
      $region63: #{tpu_custom_call.1} parent=5 // pred_region
        %s477 = ssub.s32 %s25, 1
        %s478 = smul.u32 16, %s30
        %p479 = scmp.lt.s32.totalorder %s478, 31
        %s480 = scalar_select %p479, %s478, 31
        %s481 = smul.addr %s480, 4
        %s482 = scalar_lea.vmem %s0, %s481
        %p483 = pneg %p51
        %p484 = pneg %p48
        %s485 = smul.u32 16, %s30
        %p486 = scmp.lt.s32.totalorder %s485, 31
        %s487 = scalar_select %p486, %s485, 31
        %s488 = smul.addr %s487, 4
        %s489 = scalar_lea.vmem %s1, %s488
        %p490 = pneg %p77
        %p491 = pneg %p74
        %s492 = smul.u32 16, %s30
        %p493 = scmp.lt.s32.totalorder %s492, 31
        %s494 = scalar_select %p493, %s492, 31
        %s495 = smul.addr %s494, 8
        %s496 = scalar_lea.vmem %s2, %s495
        %p497 = pneg %p103
        %p498 = pneg %p100
        %p499 = pneg %p124
        %p500 = pneg %p121
        %p501 = pneg %p145
        %p502 = pneg %p142
        %p503 = pneg %p166
        %p504 = pneg %p163
        %p505 = pneg %p187
        %p506 = pneg %p184
        %p507 = pneg %p208
        %p508 = pneg %p205
        %p509 = pneg %p229
        %p510 = pneg %p226
        %p511 = pneg %p250
        %p512 = pneg %p247
        %p513 = pneg %p271
        %p514 = pneg %p268
        %p515 = pneg %p297
        %p516 = pneg %p294
        %s517 = smul.u32 16, %s30
        %p518 = scmp.lt.s32.totalorder %s517, 31
        %s519 = scalar_select %p518, %s517, 31
        %s520 = smul.addr %s519, 8
        %s521 = scalar_lea.vmem %s11, %s520
        %p522 = pneg %p323
        %p523 = pneg %p320
        %s524 = smul.u32 16, %s30
        %p525 = scmp.lt.s32.totalorder %s524, 31
        %s526 = scalar_select %p525, %s524, 31
        %s527 = smul.addr %s526, 8
        %s528 = scalar_lea.vmem %s12, %s527
        %p529 = pneg %p349
        %p530 = pneg %p346
        %s531 = smul.u32 16, %s30
        %p532 = scmp.lt.s32.totalorder %s531, 31
        %s533 = scalar_select %p532, %s531, 31
        %s534 = smul.addr %s533, 8
        %s535 = scalar_lea.vmem %s13, %s534
        %p536 = pneg %p375
        %p537 = pneg %p372
        %s538 = smul.u32 16, %s30
        %p539 = scmp.lt.s32.totalorder %s538, 31
        %s540 = scalar_select %p539, %s538, 31
        %s541 = smul.addr %s540, 8
        %s542 = scalar_lea.vmem %s14, %s541
        %p543 = pneg %p401
        %p544 = pneg %p398
        %s545 = sand.u32 %s388, 1
        %s546 = scalar_lea.sflag [#allocation3], %s545
        %s547 = sand.u32 %s388, 1
        %s548 = smul.addr %s547, 2
        %s549 = scalar_lea.vmem [#allocation2], %s548
        %s550 = smul.u32 16, %s30
        %p551 = scmp.lt.s32.totalorder %s550, 31
        %s552 = scalar_select %p551, %s550, 31
        %s553 = smul.addr %s552, 4
        %s554 = scalar_lea.vmem %s0, %s553
        %s555 = smul.u32 16, %s30
        %s556 = smul.u32 16, %s30
        %p557 = scmp.lt.s32.totalorder %s556, 31
        %s558 = scalar_select %p557, %s556, 31
        %s559 = smul.addr %s558, 4
        %s560 = scalar_lea.vmem %s1, %s559
        %s561 = smul.u32 16, %s30
        %s562 = smul.u32 16, %s30
        %p563 = scmp.lt.s32.totalorder %s562, 31
        %s564 = scalar_select %p563, %s562, 31
        %s565 = smul.addr %s564, 8
        %s566 = scalar_lea.vmem %s2, %s565
        %s567 = smul.u32 16, %s30
        %s568 = smul.u32 16, %s30
        %p569 = scmp.lt.s32.totalorder %s568, 31
        %s570 = scalar_select %p569, %s568, 31
        %s571 = smul.addr %s570, 8
        %s572 = scalar_lea.vmem %s11, %s571
        %s573 = smul.u32 16, %s30
        %s574 = smul.u32 16, %s30
        %p575 = scmp.lt.s32.totalorder %s574, 31
        %s576 = scalar_select %p575, %s574, 31
        %s577 = smul.addr %s576, 8
        %s578 = scalar_lea.vmem %s12, %s577
        %s579 = smul.u32 16, %s30
        %s580 = smul.u32 16, %s30
        %p581 = scmp.lt.s32.totalorder %s580, 31
        %s582 = scalar_select %p581, %s580, 31
        %s583 = smul.addr %s582, 8
        %s584 = scalar_lea.vmem %s13, %s583
        %s585 = smul.u32 16, %s30
        %s586 = smul.u32 16, %s30
        %p587 = scmp.lt.s32.totalorder %s586, 31
        %s588 = scalar_select %p587, %s586, 31
        %s589 = smul.addr %s588, 8
        %s590 = scalar_lea.vmem %s14, %s589
        %s591 = smul.u32 16, %s30
        %v593 = vld [vmem:[%s554] sm:$0xf]
        %v594 = vld [vmem:[%s554 + $0x4] sm:$0xf]
        %v595 = vld [vmem:[%s554 + $0x8] sm:$0xf]
        %v596 = vld [vmem:[%s554 + $0xc] sm:$0xf]
        %v597 = vld [vmem:[%s554 + $0x10] sm:$0xf]
        %v598 = vld [vmem:[%s554 + $0x14] sm:$0xf]
        %v599 = vld [vmem:[%s554 + $0x18] sm:$0xf]
        %v600 = vld [vmem:[%s554 + $0x1c] sm:$0xf]
        %v601 = vld [vmem:[%s554 + $0x20] sm:$0xf]
        %v602 = vld [vmem:[%s554 + $0x24] sm:$0xf]
        %v603 = vld [vmem:[%s554 + $0x28] sm:$0xf]
        %v604 = vld [vmem:[%s554 + $0x2c] sm:$0xf]
        %v605 = vld [vmem:[%s554 + $0x30] sm:$0xf]
        %v606 = vld [vmem:[%s554 + $0x34] sm:$0xf]
        %v607 = vld [vmem:[%s554 + $0x38] sm:$0xf]
        %v608 = vld [vmem:[%s554 + $0x3c] sm:$0xf]
        %v609 = vld [vmem:[%s3] sm:$0xf]
        %v610 = vld [vmem:[%s3 + $0x4] sm:$0xf]
        %v611 = vld [vmem:[%s4] sm:$0x1]
        %v613 = vlaneseq
        %v614 = vshrl.u32 %v613, 7
        %v615 = vsub.s32 0, %v614
        %v616 = vrot.slane %v611, %v615
        %v634 = vunpack.c.l.b16 %v593
        %v635 = vunpack.c.l.b16 %v594
        %v636 = vunpack.c.l.b16 %v595
        %v637 = vunpack.c.l.b16 %v596
        %v638 = vunpack.c.l.b16 %v597
        %v639 = vunpack.c.l.b16 %v598
        %v640 = vunpack.c.l.b16 %v599
        %v641 = vunpack.c.l.b16 %v600
        %v642 = vunpack.c.l.b16 %v601
        %v643 = vunpack.c.l.b16 %v602
        %v644 = vunpack.c.l.b16 %v603
        %v645 = vunpack.c.l.b16 %v604
        %v646 = vunpack.c.l.b16 %v605
        %v647 = vunpack.c.l.b16 %v606
        %v648 = vunpack.c.l.b16 %v607
        %v649 = vunpack.c.l.b16 %v608
        %v650 = vpack.c.b16 %v635, %v634
        %v651 = vpack.c.b16 %v637, %v636
        %v652 = vpack.c.b16 %v639, %v638
        %v653 = vpack.c.b16 %v641, %v640
        %v654 = vpack.c.b16 %v643, %v642
        %v655 = vpack.c.b16 %v645, %v644
        %v656 = vpack.c.b16 %v647, %v646
        %v657 = vpack.c.b16 %v649, %v648
        %v660 = vunpack.c.l.b16 %v609
        %v661 = vunpack.c.l.b16 %v610
        %v662 = vpack.c.b16 %v661, %v660
        %vm664 = vcmask 130048
        %v666 = vsel %vm664, %v650, 0
        %v669 = vsel %vm664, %v651, 0
        %v672 = vsel %vm664, %v652, 0
        %v675 = vsel %vm664, %v653, 0
        %v678 = vsel %vm664, %v654, 0
        %v681 = vsel %vm664, %v655, 0
        %v684 = vsel %vm664, %v656, 0
        %v687 = vsel %vm664, %v657, 0
        %689 = vmatprep.subr.bf16.mxu0 0
        %690 = vmatpush1.bf16.msra.mxu0 0
        %691 = vmatprep.subr.bf16.mxu0 0
        %692 = vmatpush1.bf16.msra.mxu0 0
        %693 = vmatprep.subr.bf16.mxu0 0
        %694 = vmatpush1.bf16.msra.mxu0 0
        %695 = vmatprep.subr.bf16.mxu0 0
        %696 = vmatpush1.bf16.msra.mxu0 0
        %697 = vmatprep.subr.bf16.mxu0 0
        %698 = vmatpush1.bf16.msra.mxu0 0
        %699 = vmatprep.subr.bf16.mxu0 0
        %700 = vmatpush1.bf16.msra.mxu0 0
        %701 = vmatprep.subr.bf16.mxu0 0
        %702 = vmatpush1.bf16.msra.mxu0 0
        %703 = vmatprep.subr.bf16.mxu0 0
        %704 = vmatpush1.bf16.msra.mxu0 %v662
        %705 = vmatprep.subr.bf16.mxu0 0
        %706 = vmatpush2.bf16.msra.mxu0 0
        %707 = vmatprep.subr.bf16.mxu0 0
        %708 = vmatpush2.bf16.msra.mxu0 0
        %709 = vmatprep.subr.bf16.mxu0 0
        %710 = vmatpush2.bf16.msra.mxu0 0
        %711 = vmatprep.subr.bf16.mxu0 0
        %712 = vmatpush2.bf16.msra.mxu0 0
        %713 = vmatprep.subr.bf16.mxu0 0
        %714 = vmatpush2.bf16.msra.mxu0 0
        %715 = vmatprep.subr.bf16.mxu0 0
        %716 = vmatpush2.bf16.msra.mxu0 0
        %717 = vmatprep.subr.bf16.mxu0 0
        %718 = vmatpush2.bf16.msra.mxu0 0
        %719 = vmatprep.subr.bf16.mxu0 0
        %720 = vmatpush2.bf16.msra.mxu0 0
        %721 = vmatprep.mubr.bf16.mxu0 0
        %722 = vmatmul.mubr.bf16.gmra.mxu0 %v666
        %v723 = vpop.f32.mrf.mxu0
        %v724 = vadd.f32 %v616, %v723
        %v725 = vpop.f32.mrf.mxu0
        %v726 = vpop.f32.mrf.mxu0
        %v727 = vadd.f32 %v616, %v726
        %v728 = vpop.f32.mrf.mxu0
        %729 = vmatprep.mubr.bf16.mxu0 0
        %730 = vmatmul.mubr.bf16.gmra.mxu0 %v669
        %v731 = vpop.f32.mrf.mxu0
        %v732 = vadd.f32 %v616, %v731
        %v733 = vpop.f32.mrf.mxu0
        %v734 = vpop.f32.mrf.mxu0
        %v735 = vadd.f32 %v616, %v734
        %v736 = vpop.f32.mrf.mxu0
        %737 = vmatprep.mubr.bf16.mxu0 0
        %738 = vmatmul.mubr.bf16.gmra.mxu0 %v672
        %v739 = vpop.f32.mrf.mxu0
        %v740 = vadd.f32 %v616, %v739
        %v741 = vpop.f32.mrf.mxu0
        %v742 = vpop.f32.mrf.mxu0
        %v743 = vadd.f32 %v616, %v742
        %v744 = vpop.f32.mrf.mxu0
        %745 = vmatprep.mubr.bf16.mxu0 0
        %746 = vmatmul.mubr.bf16.gmra.mxu0 %v675
        %v747 = vpop.f32.mrf.mxu0
        %v748 = vadd.f32 %v616, %v747
        %v749 = vpop.f32.mrf.mxu0
        %v750 = vpop.f32.mrf.mxu0
        %v751 = vadd.f32 %v616, %v750
        %v752 = vpop.f32.mrf.mxu0
        %753 = vmatprep.mubr.bf16.mxu0 0
        %754 = vmatmul.mubr.bf16.gmra.mxu0 %v678
        %v755 = vpop.f32.mrf.mxu0
        %v756 = vadd.f32 %v616, %v755
        %v757 = vpop.f32.mrf.mxu0
        %v758 = vpop.f32.mrf.mxu0
        %v759 = vadd.f32 %v616, %v758
        %v760 = vpop.f32.mrf.mxu0
        %761 = vmatprep.mubr.bf16.mxu0 0
        %762 = vmatmul.mubr.bf16.gmra.mxu0 %v681
        %v763 = vpop.f32.mrf.mxu0
        %v764 = vadd.f32 %v616, %v763
        %v765 = vpop.f32.mrf.mxu0
        %v766 = vpop.f32.mrf.mxu0
        %v767 = vadd.f32 %v616, %v766
        %v768 = vpop.f32.mrf.mxu0
        %769 = vmatprep.mubr.bf16.mxu0 0
        %770 = vmatmul.mubr.bf16.gmra.mxu0 %v684
        %v771 = vpop.f32.mrf.mxu0
        %v772 = vadd.f32 %v616, %v771
        %v773 = vpop.f32.mrf.mxu0
        %v774 = vpop.f32.mrf.mxu0
        %v775 = vadd.f32 %v616, %v774
        %v776 = vpop.f32.mrf.mxu0
        %777 = vmatprep.mubr.bf16.mxu0 0
        %778 = vmatmul.mubr.bf16.gmra.mxu0 %v687
        %v779 = vpop.f32.mrf.mxu0
        %v780 = vadd.f32 %v616, %v779
        %v781 = vpop.f32.mrf.mxu0
        %v782 = vpop.f32.mrf.mxu0
        %v783 = vadd.f32 %v616, %v782
        %v784 = vpop.f32.mrf.mxu0
        %785 = vdwg.mxu0
        %v786 = vmax.f32 %v724, 0.0
        %v787 = vmax.f32 %v727, 0.0
        %v788 = vmax.f32 %v732, 0.0
        %v789 = vmax.f32 %v735, 0.0
        %v790 = vmax.f32 %v740, 0.0
        %v791 = vmax.f32 %v743, 0.0
        %v792 = vmax.f32 %v748, 0.0
        %v793 = vmax.f32 %v751, 0.0
        %v794 = vmax.f32 %v756, 0.0
        %v795 = vmax.f32 %v759, 0.0
        %v796 = vmax.f32 %v764, 0.0
        %v797 = vmax.f32 %v767, 0.0
        %v798 = vmax.f32 %v772, 0.0
        %v799 = vmax.f32 %v775, 0.0
        %v800 = vmax.f32 %v780, 0.0
        %v801 = vmax.f32 %v783, 0.0
        %v802 = vpack.c.bf16 %v787, %v786
        %v803 = vpack.c.bf16 %v789, %v788
        %v804 = vpack.c.bf16 %v791, %v790
        %v805 = vpack.c.bf16 %v793, %v792
        %v806 = vpack.c.bf16 %v795, %v794
        %v807 = vpack.c.bf16 %v797, %v796
        %v808 = vpack.c.bf16 %v799, %v798
        %v809 = vpack.c.bf16 %v801, %v800
        %v810 = vld [vmem:[%s5] sm:$0xf]
        %v811 = vld [vmem:[%s5 + $0x4] sm:$0xf]
        %v812 = vld [vmem:[%s5 + $0x8] sm:$0xf]
        %v813 = vld [vmem:[%s5 + $0xc] sm:$0xf]
        %v814 = vld [vmem:[%s6] sm:$0x1]
        %v816 = vlaneseq
        %v817 = vshrl.u32 %v816, 7
        %v818 = vsub.s32 0, %v817
        %v819 = vrot.slane %v814, %v818
        %v825 = vunpack.c.l.b16 %v810
        %v826 = vunpack.c.l.b16 %v811
        %v827 = vunpack.c.l.b16 %v812
        %v828 = vunpack.c.l.b16 %v813
        %v829 = vpack.c.b16 %v826, %v825
        %v830 = vpack.c.b16 %v828, %v827
        %vm833 = vcmask 261120
        %v835 = vsel %vm833, %v802, 0
        %v838 = vsel %vm833, %v803, 0
        %v841 = vsel %vm833, %v804, 0
        %v844 = vsel %vm833, %v805, 0
        %v847 = vsel %vm833, %v806, 0
        %v850 = vsel %vm833, %v807, 0
        %v853 = vsel %vm833, %v808, 0
        %v856 = vsel %vm833, %v809, 0
        %858 = vmatprep.subr.bf16.mxu0 0
        %859 = vmatpush1.bf16.msra.mxu0 0
        %860 = vmatprep.subr.bf16.mxu0 0
        %861 = vmatpush1.bf16.msra.mxu0 0
        %862 = vmatprep.subr.bf16.mxu0 0
        %863 = vmatpush1.bf16.msra.mxu0 0
        %864 = vmatprep.subr.bf16.mxu0 0
        %865 = vmatpush1.bf16.msra.mxu0 0
        %866 = vmatprep.subr.bf16.mxu0 0
        %867 = vmatpush1.bf16.msra.mxu0 0
        %868 = vmatprep.subr.bf16.mxu0 0
        %869 = vmatpush1.bf16.msra.mxu0 0
        %870 = vmatprep.subr.bf16.mxu0 0
        %871 = vmatpush1.bf16.msra.mxu0 %v830
        %872 = vmatprep.subr.bf16.mxu0 0
        %873 = vmatpush1.bf16.msra.mxu0 %v829
        %874 = vmatprep.subr.bf16.mxu0 0
        %875 = vmatpush2.bf16.msra.mxu0 0
        %876 = vmatprep.subr.bf16.mxu0 0
        %877 = vmatpush2.bf16.msra.mxu0 0
        %878 = vmatprep.subr.bf16.mxu0 0
        %879 = vmatpush2.bf16.msra.mxu0 0
        %880 = vmatprep.subr.bf16.mxu0 0
        %881 = vmatpush2.bf16.msra.mxu0 0
        %882 = vmatprep.subr.bf16.mxu0 0
        %883 = vmatpush2.bf16.msra.mxu0 0
        %884 = vmatprep.subr.bf16.mxu0 0
        %885 = vmatpush2.bf16.msra.mxu0 0
        %886 = vmatprep.subr.bf16.mxu0 0
        %887 = vmatpush2.bf16.msra.mxu0 0
        %888 = vmatprep.subr.bf16.mxu0 0
        %889 = vmatpush2.bf16.msra.mxu0 0
        %890 = vmatprep.mubr.bf16.mxu0 0
        %891 = vmatmul.mubr.bf16.gmra.mxu0 %v835
        %v892 = vpop.f32.mrf.mxu0
        %v893 = vadd.f32 %v819, %v892
        %v894 = vpop.f32.mrf.mxu0
        %v895 = vpop.f32.mrf.mxu0
        %v896 = vadd.f32 %v819, %v895
        %v897 = vpop.f32.mrf.mxu0
        %898 = vmatprep.mubr.bf16.mxu0 0
        %899 = vmatmul.mubr.bf16.gmra.mxu0 %v838
        %v900 = vpop.f32.mrf.mxu0
        %v901 = vadd.f32 %v819, %v900
        %v902 = vpop.f32.mrf.mxu0
        %v903 = vpop.f32.mrf.mxu0
        %v904 = vadd.f32 %v819, %v903
        %v905 = vpop.f32.mrf.mxu0
        %906 = vmatprep.mubr.bf16.mxu0 0
        %907 = vmatmul.mubr.bf16.gmra.mxu0 %v841
        %v908 = vpop.f32.mrf.mxu0
        %v909 = vadd.f32 %v819, %v908
        %v910 = vpop.f32.mrf.mxu0
        %v911 = vpop.f32.mrf.mxu0
        %v912 = vadd.f32 %v819, %v911
        %v913 = vpop.f32.mrf.mxu0
        %914 = vmatprep.mubr.bf16.mxu0 0
        %915 = vmatmul.mubr.bf16.gmra.mxu0 %v844
        %v916 = vpop.f32.mrf.mxu0
        %v917 = vadd.f32 %v819, %v916
        %v918 = vpop.f32.mrf.mxu0
        %v919 = vpop.f32.mrf.mxu0
        %v920 = vadd.f32 %v819, %v919
        %v921 = vpop.f32.mrf.mxu0
        %922 = vmatprep.mubr.bf16.mxu0 0
        %923 = vmatmul.mubr.bf16.gmra.mxu0 %v847
        %v924 = vpop.f32.mrf.mxu0
        %v925 = vadd.f32 %v819, %v924
        %v926 = vpop.f32.mrf.mxu0
        %v927 = vpop.f32.mrf.mxu0
        %v928 = vadd.f32 %v819, %v927
        %v929 = vpop.f32.mrf.mxu0
        %930 = vmatprep.mubr.bf16.mxu0 0
        %931 = vmatmul.mubr.bf16.gmra.mxu0 %v850
        %v932 = vpop.f32.mrf.mxu0
        %v933 = vadd.f32 %v819, %v932
        %v934 = vpop.f32.mrf.mxu0
        %v935 = vpop.f32.mrf.mxu0
        %v936 = vadd.f32 %v819, %v935
        %v937 = vpop.f32.mrf.mxu0
        %938 = vmatprep.mubr.bf16.mxu0 0
        %939 = vmatmul.mubr.bf16.gmra.mxu0 %v853
        %v940 = vpop.f32.mrf.mxu0
        %v941 = vadd.f32 %v819, %v940
        %v942 = vpop.f32.mrf.mxu0
        %v943 = vpop.f32.mrf.mxu0
        %v944 = vadd.f32 %v819, %v943
        %v945 = vpop.f32.mrf.mxu0
        %946 = vmatprep.mubr.bf16.mxu0 0
        %947 = vmatmul.mubr.bf16.gmra.mxu0 %v856
        %v948 = vpop.f32.mrf.mxu0
        %v949 = vadd.f32 %v819, %v948
        %v950 = vpop.f32.mrf.mxu0
        %v951 = vpop.f32.mrf.mxu0
        %v952 = vadd.f32 %v819, %v951
        %v953 = vpop.f32.mrf.mxu0
        %954 = vdwg.mxu0
        %v955 = vmul.f32 %v893, 0.5
        %v956 = vmul.f32 %v896, 0.5
        %v957 = vmul.f32 %v901, 0.5
        %v958 = vmul.f32 %v904, 0.5
        %v959 = vmul.f32 %v909, 0.5
        %v960 = vmul.f32 %v912, 0.5
        %v961 = vmul.f32 %v917, 0.5
        %v962 = vmul.f32 %v920, 0.5
        %v963 = vmul.f32 %v925, 0.5
        %v964 = vmul.f32 %v928, 0.5
        %v965 = vmul.f32 %v933, 0.5
        %v966 = vmul.f32 %v936, 0.5
        %v967 = vmul.f32 %v941, 0.5
        %v968 = vmul.f32 %v944, 0.5
        %v969 = vmul.f32 %v949, 0.5
        %v970 = vmul.f32 %v952, 0.5
        %v971 = vmul.f32 %v955, 1.442695
        %v972 = vpow.pop %v971
        %v973 = vmul.f32 %v956, 1.442695
        %v974 = vpow.pop %v973
        %v975 = vmul.f32 %v957, 1.442695
        %v976 = vpow.pop %v975
        %v977 = vmul.f32 %v958, 1.442695
        %v978 = vpow.pop %v977
        %v979 = vmul.f32 %v959, 1.442695
        %v980 = vpow.pop %v979
        %v981 = vmul.f32 %v960, 1.442695
        %v982 = vpow.pop %v981
        %v983 = vmul.f32 %v961, 1.442695
        %v984 = vpow.pop %v983
        %v985 = vmul.f32 %v962, 1.442695
        %v986 = vpow.pop %v985
        %v987 = vmul.f32 %v963, 1.442695
        %v988 = vpow.pop %v987
        %v989 = vmul.f32 %v964, 1.442695
        %v990 = vpow.pop %v989
        %v991 = vmul.f32 %v965, 1.442695
        %v992 = vpow.pop %v991
        %v993 = vmul.f32 %v966, 1.442695
        %v994 = vpow.pop %v993
        %v995 = vmul.f32 %v967, 1.442695
        %v996 = vpow.pop %v995
        %v997 = vmul.f32 %v968, 1.442695
        %v998 = vpow.pop %v997
        %v999 = vmul.f32 %v969, 1.442695
        %v1000 = vpow.pop %v999
        %v1001 = vmul.f32 %v970, 1.442695
        %v1002 = vpow.pop %v1001
        %v1003 = vmul.f32 %v972, %v972
        %v1004 = vmul.f32 %v974, %v974
        %v1005 = vmul.f32 %v976, %v976
        %v1006 = vmul.f32 %v978, %v978
        %v1007 = vmul.f32 %v980, %v980
        %v1008 = vmul.f32 %v982, %v982
        %v1009 = vmul.f32 %v984, %v984
        %v1010 = vmul.f32 %v986, %v986
        %v1011 = vmul.f32 %v988, %v988
        %v1012 = vmul.f32 %v990, %v990
        %v1013 = vmul.f32 %v992, %v992
        %v1014 = vmul.f32 %v994, %v994
        %v1015 = vmul.f32 %v996, %v996
        %v1016 = vmul.f32 %v998, %v998
        %v1017 = vmul.f32 %v1000, %v1000
        %v1018 = vmul.f32 %v1002, %v1002
        %v1019 = vld [vmem:[%s560] sm:$0xf]
        %v1020 = vld [vmem:[%s560 + $0x4] sm:$0xf]
        %v1021 = vld [vmem:[%s560 + $0x8] sm:$0xf]
        %v1022 = vld [vmem:[%s560 + $0xc] sm:$0xf]
        %v1023 = vld [vmem:[%s560 + $0x10] sm:$0xf]
        %v1024 = vld [vmem:[%s560 + $0x14] sm:$0xf]
        %v1025 = vld [vmem:[%s560 + $0x18] sm:$0xf]
        %v1026 = vld [vmem:[%s560 + $0x1c] sm:$0xf]
        %v1027 = vld [vmem:[%s560 + $0x20] sm:$0xf]
        %v1028 = vld [vmem:[%s560 + $0x24] sm:$0xf]
        %v1029 = vld [vmem:[%s560 + $0x28] sm:$0xf]
        %v1030 = vld [vmem:[%s560 + $0x2c] sm:$0xf]
        %v1031 = vld [vmem:[%s560 + $0x30] sm:$0xf]
        %v1032 = vld [vmem:[%s560 + $0x34] sm:$0xf]
        %v1033 = vld [vmem:[%s560 + $0x38] sm:$0xf]
        %v1034 = vld [vmem:[%s560 + $0x3c] sm:$0xf]
        %v1035 = vunpack.c.l.bf16 %v1019
        %v1036 = vunpack.c.l.bf16 %v1020
        %v1037 = vunpack.c.l.bf16 %v1021
        %v1038 = vunpack.c.l.bf16 %v1022
        %v1039 = vunpack.c.l.bf16 %v1023
        %v1040 = vunpack.c.l.bf16 %v1024
        %v1041 = vunpack.c.l.bf16 %v1025
        %v1042 = vunpack.c.l.bf16 %v1026
        %v1043 = vunpack.c.l.bf16 %v1027
        %v1044 = vunpack.c.l.bf16 %v1028
        %v1045 = vunpack.c.l.bf16 %v1029
        %v1046 = vunpack.c.l.bf16 %v1030
        %v1047 = vunpack.c.l.bf16 %v1031
        %v1048 = vunpack.c.l.bf16 %v1032
        %v1049 = vunpack.c.l.bf16 %v1033
        %v1050 = vunpack.c.l.bf16 %v1034
        %1067 = vrot.lane.b32.xlu0 %v972, 120
        %v1068 = vpop.permute.xlu0 %1067
        %1069 = vrot.lane.b32.xlu0 %v974, 120
        %v1070 = vpop.permute.xlu0 %1069
        %1071 = vrot.lane.b32.xlu0 %v976, 120
        %v1072 = vpop.permute.xlu0 %1071
        %1073 = vrot.lane.b32.xlu0 %v978, 120
        %v1074 = vpop.permute.xlu0 %1073
        %1075 = vrot.lane.b32.xlu0 %v980, 120
        %v1076 = vpop.permute.xlu0 %1075
        %1077 = vrot.lane.b32.xlu0 %v982, 120
        %v1078 = vpop.permute.xlu0 %1077
        %1079 = vrot.lane.b32.xlu0 %v984, 120
        %v1080 = vpop.permute.xlu0 %1079
        %1081 = vrot.lane.b32.xlu0 %v986, 120
        %v1082 = vpop.permute.xlu0 %1081
        %1083 = vrot.lane.b32.xlu0 %v988, 120
        %v1084 = vpop.permute.xlu0 %1083
        %1085 = vrot.lane.b32.xlu0 %v990, 120
        %v1086 = vpop.permute.xlu0 %1085
        %1087 = vrot.lane.b32.xlu0 %v992, 120
        %v1088 = vpop.permute.xlu0 %1087
        %1089 = vrot.lane.b32.xlu0 %v994, 120
        %v1090 = vpop.permute.xlu0 %1089
        %1091 = vrot.lane.b32.xlu0 %v996, 120
        %v1092 = vpop.permute.xlu0 %1091
        %1093 = vrot.lane.b32.xlu0 %v998, 120
        %v1094 = vpop.permute.xlu0 %1093
        %1095 = vrot.lane.b32.xlu0 %v1000, 120
        %v1096 = vpop.permute.xlu0 %1095
        %1097 = vrot.lane.b32.xlu0 %v1002, 120
        %v1098 = vpop.permute.xlu0 %1097
        %v1115 = vmul.f32 %v1035, %v1068
        %v1116 = vmul.f32 %v1036, %v1070
        %v1117 = vmul.f32 %v1037, %v1072
        %v1118 = vmul.f32 %v1038, %v1074
        %v1119 = vmul.f32 %v1039, %v1076
        %v1120 = vmul.f32 %v1040, %v1078
        %v1121 = vmul.f32 %v1041, %v1080
        %v1122 = vmul.f32 %v1042, %v1082
        %v1123 = vmul.f32 %v1043, %v1084
        %v1124 = vmul.f32 %v1044, %v1086
        %v1125 = vmul.f32 %v1045, %v1088
        %v1126 = vmul.f32 %v1046, %v1090
        %v1127 = vmul.f32 %v1047, %v1092
        %v1128 = vmul.f32 %v1048, %v1094
        %v1129 = vmul.f32 %v1049, %v1096
        %v1130 = vmul.f32 %v1050, %v1098
        %v1131 = vadd.f32 %v893, %v1115
        %v1132 = vadd.f32 %v896, %v1116
        %v1133 = vadd.f32 %v901, %v1117
        %v1134 = vadd.f32 %v904, %v1118
        %v1135 = vadd.f32 %v909, %v1119
        %v1136 = vadd.f32 %v912, %v1120
        %v1137 = vadd.f32 %v917, %v1121
        %v1138 = vadd.f32 %v920, %v1122
        %v1139 = vadd.f32 %v925, %v1123
        %v1140 = vadd.f32 %v928, %v1124
        %v1141 = vadd.f32 %v933, %v1125
        %v1142 = vadd.f32 %v936, %v1126
        %v1143 = vadd.f32 %v941, %v1127
        %v1144 = vadd.f32 %v944, %v1128
        %v1145 = vadd.f32 %v949, %v1129
        %v1146 = vadd.f32 %v952, %v1130
        %v1147 = vpack.c.bf16 %v1132, %v1131
        %v1148 = vpack.c.bf16 %v1134, %v1133
        %v1149 = vpack.c.bf16 %v1136, %v1135
        %v1150 = vpack.c.bf16 %v1138, %v1137
        %v1151 = vpack.c.bf16 %v1140, %v1139
        %v1152 = vpack.c.bf16 %v1142, %v1141
        %v1153 = vpack.c.bf16 %v1144, %v1143
        %v1154 = vpack.c.bf16 %v1146, %v1145
        %v1155 = vld [vmem:[%s7] sm:$0xf]
        %v1156 = vld [vmem:[%s8] sm:$0x1]
        %v1158 = vlaneseq
        %v1159 = vshrl.u32 %v1158, 7
        %v1160 = vsub.s32 0, %v1159
        %v1161 = vrot.slane %v1156, %v1160
        %vm1163 = vcmask 64512
        %v1165 = vsel %vm1163, %v1147, 0
        %v1168 = vsel %vm1163, %v1148, 0
        %v1171 = vsel %vm1163, %v1149, 0
        %v1174 = vsel %vm1163, %v1150, 0
        %v1177 = vsel %vm1163, %v1151, 0
        %v1180 = vsel %vm1163, %v1152, 0
        %v1183 = vsel %vm1163, %v1153, 0
        %v1186 = vsel %vm1163, %v1154, 0
        %vm1188 = vcmask 1043456
        %v1190 = vsel %vm1188, %v1155, 0
        %1192 = vmatprep.subr.bf16.mxu0 0
        %1193 = vmatpush1.bf16.msra.mxu0 0
        %1194 = vmatprep.subr.bf16.mxu0 0
        %1195 = vmatpush1.bf16.msra.mxu0 0
        %1196 = vmatprep.subr.bf16.mxu0 0
        %1197 = vmatpush1.bf16.msra.mxu0 0
        %1198 = vmatprep.subr.bf16.mxu0 0
        %1199 = vmatpush1.bf16.msra.mxu0 0
        %1200 = vmatprep.subr.bf16.mxu0 0
        %1201 = vmatpush1.bf16.msra.mxu0 0
        %1202 = vmatprep.subr.bf16.mxu0 0
        %1203 = vmatpush1.bf16.msra.mxu0 0
        %1204 = vmatprep.subr.bf16.mxu0 0
        %1205 = vmatpush1.bf16.msra.mxu0 0
        %1206 = vmatprep.subr.bf16.mxu0 0
        %1207 = vmatpush1.bf16.msra.mxu0 %v1190
        %1208 = vmatprep.subr.bf16.mxu0 0
        %1209 = vmatpush2.bf16.msra.mxu0 0
        %1210 = vmatprep.subr.bf16.mxu0 0
        %1211 = vmatpush2.bf16.msra.mxu0 0
        %1212 = vmatprep.subr.bf16.mxu0 0
        %1213 = vmatpush2.bf16.msra.mxu0 0
        %1214 = vmatprep.subr.bf16.mxu0 0
        %1215 = vmatpush2.bf16.msra.mxu0 0
        %1216 = vmatprep.subr.bf16.mxu0 0
        %1217 = vmatpush2.bf16.msra.mxu0 0
        %1218 = vmatprep.subr.bf16.mxu0 0
        %1219 = vmatpush2.bf16.msra.mxu0 0
        %1220 = vmatprep.subr.bf16.mxu0 0
        %1221 = vmatpush2.bf16.msra.mxu0 0
        %1222 = vmatprep.subr.bf16.mxu0 0
        %1223 = vmatpush2.bf16.msra.mxu0 0
        %1224 = vmatprep.mubr.bf16.mxu0 0
        %1225 = vmatmul.mubr.bf16.gmra.mxu0 %v1165
        %v1226 = vpop.f32.mrf.mxu0
        %v1227 = vadd.f32 %v1161, %v1226
        %v1228 = vpop.f32.mrf.mxu0
        %v1229 = vpop.f32.mrf.mxu0
        %v1230 = vadd.f32 %v1161, %v1229
        %v1231 = vpop.f32.mrf.mxu0
        %1232 = vmatprep.mubr.bf16.mxu0 0
        %1233 = vmatmul.mubr.bf16.gmra.mxu0 %v1168
        %v1234 = vpop.f32.mrf.mxu0
        %v1235 = vadd.f32 %v1161, %v1234
        %v1236 = vpop.f32.mrf.mxu0
        %v1237 = vpop.f32.mrf.mxu0
        %v1238 = vadd.f32 %v1161, %v1237
        %v1239 = vpop.f32.mrf.mxu0
        %1240 = vmatprep.mubr.bf16.mxu0 0
        %1241 = vmatmul.mubr.bf16.gmra.mxu0 %v1171
        %v1242 = vpop.f32.mrf.mxu0
        %v1243 = vadd.f32 %v1161, %v1242
        %v1244 = vpop.f32.mrf.mxu0
        %v1245 = vpop.f32.mrf.mxu0
        %v1246 = vadd.f32 %v1161, %v1245
        %v1247 = vpop.f32.mrf.mxu0
        %1248 = vmatprep.mubr.bf16.mxu0 0
        %1249 = vmatmul.mubr.bf16.gmra.mxu0 %v1174
        %v1250 = vpop.f32.mrf.mxu0
        %v1251 = vadd.f32 %v1161, %v1250
        %v1252 = vpop.f32.mrf.mxu0
        %v1253 = vpop.f32.mrf.mxu0
        %v1254 = vadd.f32 %v1161, %v1253
        %v1255 = vpop.f32.mrf.mxu0
        %1256 = vmatprep.mubr.bf16.mxu0 0
        %1257 = vmatmul.mubr.bf16.gmra.mxu0 %v1177
        %v1258 = vpop.f32.mrf.mxu0
        %v1259 = vadd.f32 %v1161, %v1258
        %v1260 = vpop.f32.mrf.mxu0
        %v1261 = vpop.f32.mrf.mxu0
        %v1262 = vadd.f32 %v1161, %v1261
        %v1263 = vpop.f32.mrf.mxu0
        %1264 = vmatprep.mubr.bf16.mxu0 0
        %1265 = vmatmul.mubr.bf16.gmra.mxu0 %v1180
        %v1266 = vpop.f32.mrf.mxu0
        %v1267 = vadd.f32 %v1161, %v1266
        %v1268 = vpop.f32.mrf.mxu0
        %v1269 = vpop.f32.mrf.mxu0
        %v1270 = vadd.f32 %v1161, %v1269
        %v1271 = vpop.f32.mrf.mxu0
        %1272 = vmatprep.mubr.bf16.mxu0 0
        %1273 = vmatmul.mubr.bf16.gmra.mxu0 %v1183
        %v1274 = vpop.f32.mrf.mxu0
        %v1275 = vadd.f32 %v1161, %v1274
        %v1276 = vpop.f32.mrf.mxu0
        %v1277 = vpop.f32.mrf.mxu0
        %v1278 = vadd.f32 %v1161, %v1277
        %v1279 = vpop.f32.mrf.mxu0
        %1280 = vmatprep.mubr.bf16.mxu0 0
        %1281 = vmatmul.mubr.bf16.gmra.mxu0 %v1186
        %v1282 = vpop.f32.mrf.mxu0
        %v1283 = vadd.f32 %v1161, %v1282
        %v1284 = vpop.f32.mrf.mxu0
        %v1285 = vpop.f32.mrf.mxu0
        %v1286 = vadd.f32 %v1161, %v1285
        %v1287 = vpop.f32.mrf.mxu0
        %1288 = vdwg.mxu0
        %v1289 = vmax.f32 %v1227, 0.0
        %v1290 = vmax.f32 %v1230, 0.0
        %v1291 = vmax.f32 %v1235, 0.0
        %v1292 = vmax.f32 %v1238, 0.0
        %v1293 = vmax.f32 %v1243, 0.0
        %v1294 = vmax.f32 %v1246, 0.0
        %v1295 = vmax.f32 %v1251, 0.0
        %v1296 = vmax.f32 %v1254, 0.0
        %v1297 = vmax.f32 %v1259, 0.0
        %v1298 = vmax.f32 %v1262, 0.0
        %v1299 = vmax.f32 %v1267, 0.0
        %v1300 = vmax.f32 %v1270, 0.0
        %v1301 = vmax.f32 %v1275, 0.0
        %v1302 = vmax.f32 %v1278, 0.0
        %v1303 = vmax.f32 %v1283, 0.0
        %v1304 = vmax.f32 %v1286, 0.0
        %v1305 = vpack.c.bf16 %v1290, %v1289
        %v1306 = vpack.c.bf16 %v1292, %v1291
        %v1307 = vpack.c.bf16 %v1294, %v1293
        %v1308 = vpack.c.bf16 %v1296, %v1295
        %v1309 = vpack.c.bf16 %v1298, %v1297
        %v1310 = vpack.c.bf16 %v1300, %v1299
        %v1311 = vpack.c.bf16 %v1302, %v1301
        %v1312 = vpack.c.bf16 %v1304, %v1303
        %v1313 = vld [vmem:[%s9] sm:$0xf]
        %v1314 = vld [vmem:[%s9 + $0x4] sm:$0xf]
        %v1315 = vld [vmem:[%s9 + $0x8] sm:$0xf]
        %v1316 = vld [vmem:[%s9 + $0xc] sm:$0xf]
        %v1317 = vld [vmem:[%s10] sm:$0x1]
        %v1319 = vlaneseq
        %v1320 = vshrl.u32 %v1319, 7
        %v1321 = vsub.s32 0, %v1320
        %v1322 = vrot.slane %v1317, %v1321
        %v1328 = vunpack.c.l.b16 %v1313
        %v1329 = vunpack.c.l.b16 %v1314
        %v1330 = vunpack.c.l.b16 %v1315
        %v1331 = vunpack.c.l.b16 %v1316
        %v1332 = vpack.c.b16 %v1329, %v1328
        %v1333 = vpack.c.b16 %v1331, %v1330
        %v1337 = vsel %vm833, %v1305, 0
        %v1340 = vsel %vm833, %v1306, 0
        %v1343 = vsel %vm833, %v1307, 0
        %v1346 = vsel %vm833, %v1308, 0
        %v1349 = vsel %vm833, %v1309, 0
        %v1352 = vsel %vm833, %v1310, 0
        %v1355 = vsel %vm833, %v1311, 0
        %v1358 = vsel %vm833, %v1312, 0
        %1360 = vmatprep.subr.bf16.mxu0 0
        %1361 = vmatpush1.bf16.msra.mxu0 0
        %1362 = vmatprep.subr.bf16.mxu0 0
        %1363 = vmatpush1.bf16.msra.mxu0 0
        %1364 = vmatprep.subr.bf16.mxu0 0
        %1365 = vmatpush1.bf16.msra.mxu0 0
        %1366 = vmatprep.subr.bf16.mxu0 0
        %1367 = vmatpush1.bf16.msra.mxu0 0
        %1368 = vmatprep.subr.bf16.mxu0 0
        %1369 = vmatpush1.bf16.msra.mxu0 0
        %1370 = vmatprep.subr.bf16.mxu0 0
        %1371 = vmatpush1.bf16.msra.mxu0 0
        %1372 = vmatprep.subr.bf16.mxu0 0
        %1373 = vmatpush1.bf16.msra.mxu0 %v1333
        %1374 = vmatprep.subr.bf16.mxu0 0
        %1375 = vmatpush1.bf16.msra.mxu0 %v1332
        %1376 = vmatprep.subr.bf16.mxu0 0
        %1377 = vmatpush2.bf16.msra.mxu0 0
        %1378 = vmatprep.subr.bf16.mxu0 0
        %1379 = vmatpush2.bf16.msra.mxu0 0
        %1380 = vmatprep.subr.bf16.mxu0 0
        %1381 = vmatpush2.bf16.msra.mxu0 0
        %1382 = vmatprep.subr.bf16.mxu0 0
        %1383 = vmatpush2.bf16.msra.mxu0 0
        %1384 = vmatprep.subr.bf16.mxu0 0
        %1385 = vmatpush2.bf16.msra.mxu0 0
        %1386 = vmatprep.subr.bf16.mxu0 0
        %1387 = vmatpush2.bf16.msra.mxu0 0
        %1388 = vmatprep.subr.bf16.mxu0 0
        %1389 = vmatpush2.bf16.msra.mxu0 0
        %1390 = vmatprep.subr.bf16.mxu0 0
        %1391 = vmatpush2.bf16.msra.mxu0 0
        %1392 = vmatprep.mubr.bf16.mxu0 0
        %1393 = vmatmul.mubr.bf16.gmra.mxu0 %v1337
        %v1394 = vpop.f32.mrf.mxu0
        %v1395 = vadd.f32 %v1322, %v1394
        %v1396 = vpop.f32.mrf.mxu0
        %v1397 = vpop.f32.mrf.mxu0
        %v1398 = vadd.f32 %v1322, %v1397
        %v1399 = vpop.f32.mrf.mxu0
        %1400 = vmatprep.mubr.bf16.mxu0 0
        %1401 = vmatmul.mubr.bf16.gmra.mxu0 %v1340
        %v1402 = vpop.f32.mrf.mxu0
        %v1403 = vadd.f32 %v1322, %v1402
        %v1404 = vpop.f32.mrf.mxu0
        %v1405 = vpop.f32.mrf.mxu0
        %v1406 = vadd.f32 %v1322, %v1405
        %v1407 = vpop.f32.mrf.mxu0
        %1408 = vmatprep.mubr.bf16.mxu0 0
        %1409 = vmatmul.mubr.bf16.gmra.mxu0 %v1343
        %v1410 = vpop.f32.mrf.mxu0
        %v1411 = vadd.f32 %v1322, %v1410
        %v1412 = vpop.f32.mrf.mxu0
        %v1413 = vpop.f32.mrf.mxu0
        %v1414 = vadd.f32 %v1322, %v1413
        %v1415 = vpop.f32.mrf.mxu0
        %1416 = vmatprep.mubr.bf16.mxu0 0
        %1417 = vmatmul.mubr.bf16.gmra.mxu0 %v1346
        %v1418 = vpop.f32.mrf.mxu0
        %v1419 = vadd.f32 %v1322, %v1418
        %v1420 = vpop.f32.mrf.mxu0
        %v1421 = vpop.f32.mrf.mxu0
        %v1422 = vadd.f32 %v1322, %v1421
        %v1423 = vpop.f32.mrf.mxu0
        %1424 = vmatprep.mubr.bf16.mxu0 0
        %1425 = vmatmul.mubr.bf16.gmra.mxu0 %v1349
        %v1426 = vpop.f32.mrf.mxu0
        %v1427 = vadd.f32 %v1322, %v1426
        %v1428 = vpop.f32.mrf.mxu0
        %v1429 = vpop.f32.mrf.mxu0
        %v1430 = vadd.f32 %v1322, %v1429
        %v1431 = vpop.f32.mrf.mxu0
        %1432 = vmatprep.mubr.bf16.mxu0 0
        %1433 = vmatmul.mubr.bf16.gmra.mxu0 %v1352
        %v1434 = vpop.f32.mrf.mxu0
        %v1435 = vadd.f32 %v1322, %v1434
        %v1436 = vpop.f32.mrf.mxu0
        %v1437 = vpop.f32.mrf.mxu0
        %v1438 = vadd.f32 %v1322, %v1437
        %v1439 = vpop.f32.mrf.mxu0
        %1440 = vmatprep.mubr.bf16.mxu0 0
        %1441 = vmatmul.mubr.bf16.gmra.mxu0 %v1355
        %v1442 = vpop.f32.mrf.mxu0
        %v1443 = vadd.f32 %v1322, %v1442
        %v1444 = vpop.f32.mrf.mxu0
        %v1445 = vpop.f32.mrf.mxu0
        %v1446 = vadd.f32 %v1322, %v1445
        %v1447 = vpop.f32.mrf.mxu0
        %1448 = vmatprep.mubr.bf16.mxu0 0
        %1449 = vmatmul.mubr.bf16.gmra.mxu0 %v1358
        %v1450 = vpop.f32.mrf.mxu0
        %v1451 = vadd.f32 %v1322, %v1450
        %v1452 = vpop.f32.mrf.mxu0
        %v1453 = vpop.f32.mrf.mxu0
        %v1454 = vadd.f32 %v1322, %v1453
        %v1455 = vpop.f32.mrf.mxu0
        %1456 = vdwg.mxu0
        %1457 = vst.msk [vmem:[%s572] sm:$0xff] %vm1163, %v893
        %1458 = vst.msk [vmem:[%s572 + $0x8] sm:$0xff] %vm1163, %v896
        %1459 = vst.msk [vmem:[%s572 + $0x10] sm:$0xff] %vm1163, %v901
        %1460 = vst.msk [vmem:[%s572 + $0x18] sm:$0xff] %vm1163, %v904
        %1461 = vst.msk [vmem:[%s572 + $0x20] sm:$0xff] %vm1163, %v909
        %1462 = vst.msk [vmem:[%s572 + $0x28] sm:$0xff] %vm1163, %v912
        %1463 = vst.msk [vmem:[%s572 + $0x30] sm:$0xff] %vm1163, %v917
        %1464 = vst.msk [vmem:[%s572 + $0x38] sm:$0xff] %vm1163, %v920
        %1465 = vst.msk [vmem:[%s572 + $0x40] sm:$0xff] %vm1163, %v925
        %1466 = vst.msk [vmem:[%s572 + $0x48] sm:$0xff] %vm1163, %v928
        %1467 = vst.msk [vmem:[%s572 + $0x50] sm:$0xff] %vm1163, %v933
        %1468 = vst.msk [vmem:[%s572 + $0x58] sm:$0xff] %vm1163, %v936
        %1469 = vst.msk [vmem:[%s572 + $0x60] sm:$0xff] %vm1163, %v941
        %1470 = vst.msk [vmem:[%s572 + $0x68] sm:$0xff] %vm1163, %v944
        %1471 = vst.msk [vmem:[%s572 + $0x70] sm:$0xff] %vm1163, %v949
        %1472 = vst.msk [vmem:[%s572 + $0x78] sm:$0xff] %vm1163, %v952
        %1489 = vrot.lane.b32.xlu0 %v893, 120
        %v1490 = vpop.permute.xlu0 %1489
        %1491 = vrot.lane.b32.xlu0 %v896, 120
        %v1492 = vpop.permute.xlu0 %1491
        %1493 = vrot.lane.b32.xlu0 %v901, 120
        %v1494 = vpop.permute.xlu0 %1493
        %1495 = vrot.lane.b32.xlu0 %v904, 120
        %v1496 = vpop.permute.xlu0 %1495
        %1497 = vrot.lane.b32.xlu0 %v909, 120
        %v1498 = vpop.permute.xlu0 %1497
        %1499 = vrot.lane.b32.xlu0 %v912, 120
        %v1500 = vpop.permute.xlu0 %1499
        %1501 = vrot.lane.b32.xlu0 %v917, 120
        %v1502 = vpop.permute.xlu0 %1501
        %1503 = vrot.lane.b32.xlu0 %v920, 120
        %v1504 = vpop.permute.xlu0 %1503
        %1505 = vrot.lane.b32.xlu0 %v925, 120
        %v1506 = vpop.permute.xlu0 %1505
        %1507 = vrot.lane.b32.xlu0 %v928, 120
        %v1508 = vpop.permute.xlu0 %1507
        %1509 = vrot.lane.b32.xlu0 %v933, 120
        %v1510 = vpop.permute.xlu0 %1509
        %1511 = vrot.lane.b32.xlu0 %v936, 120
        %v1512 = vpop.permute.xlu0 %1511
        %1513 = vrot.lane.b32.xlu0 %v941, 120
        %v1514 = vpop.permute.xlu0 %1513
        %1515 = vrot.lane.b32.xlu0 %v944, 120
        %v1516 = vpop.permute.xlu0 %1515
        %1517 = vrot.lane.b32.xlu0 %v949, 120
        %v1518 = vpop.permute.xlu0 %1517
        %1519 = vrot.lane.b32.xlu0 %v952, 120
        %v1520 = vpop.permute.xlu0 %1519
        %1537 = vst.msk [vmem:[%s578] sm:$0xff] %vm1163, %v1490
        %1538 = vst.msk [vmem:[%s578 + $0x8] sm:$0xff] %vm1163, %v1492
        %1539 = vst.msk [vmem:[%s578 + $0x10] sm:$0xff] %vm1163, %v1494
        %1540 = vst.msk [vmem:[%s578 + $0x18] sm:$0xff] %vm1163, %v1496
        %1541 = vst.msk [vmem:[%s578 + $0x20] sm:$0xff] %vm1163, %v1498
        %1542 = vst.msk [vmem:[%s578 + $0x28] sm:$0xff] %vm1163, %v1500
        %1543 = vst.msk [vmem:[%s578 + $0x30] sm:$0xff] %vm1163, %v1502
        %1544 = vst.msk [vmem:[%s578 + $0x38] sm:$0xff] %vm1163, %v1504
        %1545 = vst.msk [vmem:[%s578 + $0x40] sm:$0xff] %vm1163, %v1506
        %1546 = vst.msk [vmem:[%s578 + $0x48] sm:$0xff] %vm1163, %v1508
        %1547 = vst.msk [vmem:[%s578 + $0x50] sm:$0xff] %vm1163, %v1510
        %1548 = vst.msk [vmem:[%s578 + $0x58] sm:$0xff] %vm1163, %v1512
        %1549 = vst.msk [vmem:[%s578 + $0x60] sm:$0xff] %vm1163, %v1514
        %1550 = vst.msk [vmem:[%s578 + $0x68] sm:$0xff] %vm1163, %v1516
        %1551 = vst.msk [vmem:[%s578 + $0x70] sm:$0xff] %vm1163, %v1518
        %1552 = vst.msk [vmem:[%s578 + $0x78] sm:$0xff] %vm1163, %v1520
        %1553 = vst.msk [vmem:[%s584] sm:$0xff] %vm1163, %v1131
        %1554 = vst.msk [vmem:[%s584 + $0x8] sm:$0xff] %vm1163, %v1132
        %1555 = vst.msk [vmem:[%s584 + $0x10] sm:$0xff] %vm1163, %v1133
        %1556 = vst.msk [vmem:[%s584 + $0x18] sm:$0xff] %vm1163, %v1134
        %1557 = vst.msk [vmem:[%s584 + $0x20] sm:$0xff] %vm1163, %v1135
        %1558 = vst.msk [vmem:[%s584 + $0x28] sm:$0xff] %vm1163, %v1136
        %1559 = vst.msk [vmem:[%s584 + $0x30] sm:$0xff] %vm1163, %v1137
        %1560 = vst.msk [vmem:[%s584 + $0x38] sm:$0xff] %vm1163, %v1138
        %1561 = vst.msk [vmem:[%s584 + $0x40] sm:$0xff] %vm1163, %v1139
        %1562 = vst.msk [vmem:[%s584 + $0x48] sm:$0xff] %vm1163, %v1140
        %1563 = vst.msk [vmem:[%s584 + $0x50] sm:$0xff] %vm1163, %v1141
        %1564 = vst.msk [vmem:[%s584 + $0x58] sm:$0xff] %vm1163, %v1142
        %1565 = vst.msk [vmem:[%s584 + $0x60] sm:$0xff] %vm1163, %v1143
        %1566 = vst.msk [vmem:[%s584 + $0x68] sm:$0xff] %vm1163, %v1144
        %1567 = vst.msk [vmem:[%s584 + $0x70] sm:$0xff] %vm1163, %v1145
        %1568 = vst.msk [vmem:[%s584 + $0x78] sm:$0xff] %vm1163, %v1146
        %1569 = vst.msk [vmem:[%s590] sm:$0xff] %vm664, %v1395
        %1570 = vst.msk [vmem:[%s590 + $0x8] sm:$0xff] %vm664, %v1398
        %1571 = vst.msk [vmem:[%s590 + $0x10] sm:$0xff] %vm664, %v1403
        %1572 = vst.msk [vmem:[%s590 + $0x18] sm:$0xff] %vm664, %v1406
        %1573 = vst.msk [vmem:[%s590 + $0x20] sm:$0xff] %vm664, %v1411
        %1574 = vst.msk [vmem:[%s590 + $0x28] sm:$0xff] %vm664, %v1414
        %1575 = vst.msk [vmem:[%s590 + $0x30] sm:$0xff] %vm664, %v1419
        %1576 = vst.msk [vmem:[%s590 + $0x38] sm:$0xff] %vm664, %v1422
        %1577 = vst.msk [vmem:[%s590 + $0x40] sm:$0xff] %vm664, %v1427
        %1578 = vst.msk [vmem:[%s590 + $0x48] sm:$0xff] %vm664, %v1430
        %1579 = vst.msk [vmem:[%s590 + $0x50] sm:$0xff] %vm664, %v1435
        %1580 = vst.msk [vmem:[%s590 + $0x58] sm:$0xff] %vm664, %v1438
        %1581 = vst.msk [vmem:[%s590 + $0x60] sm:$0xff] %vm664, %v1443
        %1582 = vst.msk [vmem:[%s590 + $0x68] sm:$0xff] %vm664, %v1446
        %1583 = vst.msk [vmem:[%s590 + $0x70] sm:$0xff] %vm664, %v1451
        %1584 = vst.msk [vmem:[%s590 + $0x78] sm:$0xff] %vm664, %v1454
        %v1585 = vld [vmem:[%s566] sm:$0xff]
        %v1586 = vld [vmem:[%s566 + $0x8] sm:$0xff]
        %v1587 = vld [vmem:[%s566 + $0x10] sm:$0xff]
        %v1588 = vld [vmem:[%s566 + $0x18] sm:$0xff]
        %v1589 = vld [vmem:[%s566 + $0x20] sm:$0xff]
        %v1590 = vld [vmem:[%s566 + $0x28] sm:$0xff]
        %v1591 = vld [vmem:[%s566 + $0x30] sm:$0xff]
        %v1592 = vld [vmem:[%s566 + $0x38] sm:$0xff]
        %v1593 = vld [vmem:[%s566 + $0x40] sm:$0xff]
        %v1594 = vld [vmem:[%s566 + $0x48] sm:$0xff]
        %v1595 = vld [vmem:[%s566 + $0x50] sm:$0xff]
        %v1596 = vld [vmem:[%s566 + $0x58] sm:$0xff]
        %v1597 = vld [vmem:[%s566 + $0x60] sm:$0xff]
        %v1598 = vld [vmem:[%s566 + $0x68] sm:$0xff]
        %v1599 = vld [vmem:[%s566 + $0x70] sm:$0xff]
        %v1600 = vld [vmem:[%s566 + $0x78] sm:$0xff]
        %v1601 = vsub.f32 %v1395, %v1585
        %v1602 = vsub.f32 %v1398, %v1586
        %v1603 = vsub.f32 %v1403, %v1587
        %v1604 = vsub.f32 %v1406, %v1588
        %v1605 = vsub.f32 %v1411, %v1589
        %v1606 = vsub.f32 %v1414, %v1590
        %v1607 = vsub.f32 %v1419, %v1591
        %v1608 = vsub.f32 %v1422, %v1592
        %v1609 = vsub.f32 %v1427, %v1593
        %v1610 = vsub.f32 %v1430, %v1594
        %v1611 = vsub.f32 %v1435, %v1595
        %v1612 = vsub.f32 %v1438, %v1596
        %v1613 = vsub.f32 %v1443, %v1597
        %v1614 = vsub.f32 %v1446, %v1598
        %v1615 = vsub.f32 %v1451, %v1599
        %v1616 = vsub.f32 %v1454, %v1600
        %v1617 = vadd.f32 %v893, 1.0
        %v1618 = vadd.f32 %v896, 1.0
        %v1619 = vadd.f32 %v901, 1.0
        %v1620 = vadd.f32 %v904, 1.0
        %v1621 = vadd.f32 %v909, 1.0
        %v1622 = vadd.f32 %v912, 1.0
        %v1623 = vadd.f32 %v917, 1.0
        %v1624 = vadd.f32 %v920, 1.0
        %v1625 = vadd.f32 %v925, 1.0
        %v1626 = vadd.f32 %v928, 1.0
        %v1627 = vadd.f32 %v933, 1.0
        %v1628 = vadd.f32 %v936, 1.0
        %v1629 = vadd.f32 %v941, 1.0
        %v1630 = vadd.f32 %v944, 1.0
        %v1631 = vadd.f32 %v949, 1.0
        %v1632 = vadd.f32 %v952, 1.0
        %v1633 = vmul.f32 %v893, %v893
        %v1634 = vmul.f32 %v896, %v896
        %v1635 = vmul.f32 %v901, %v901
        %v1636 = vmul.f32 %v904, %v904
        %v1637 = vmul.f32 %v909, %v909
        %v1638 = vmul.f32 %v912, %v912
        %v1639 = vmul.f32 %v917, %v917
        %v1640 = vmul.f32 %v920, %v920
        %v1641 = vmul.f32 %v925, %v925
        %v1642 = vmul.f32 %v928, %v928
        %v1643 = vmul.f32 %v933, %v933
        %v1644 = vmul.f32 %v936, %v936
        %v1645 = vmul.f32 %v941, %v941
        %v1646 = vmul.f32 %v944, %v944
        %v1647 = vmul.f32 %v949, %v949
        %v1648 = vmul.f32 %v952, %v952
        %1665 = vrot.lane.b32.xlu0 %v1633, 8
        %v1666 = vpop.permute.xlu0 %1665
        %1667 = vrot.lane.b32.xlu0 %v1634, 8
        %v1668 = vpop.permute.xlu0 %1667
        %1669 = vrot.lane.b32.xlu0 %v1635, 8
        %v1670 = vpop.permute.xlu0 %1669
        %1671 = vrot.lane.b32.xlu0 %v1636, 8
        %v1672 = vpop.permute.xlu0 %1671
        %1673 = vrot.lane.b32.xlu0 %v1637, 8
        %v1674 = vpop.permute.xlu0 %1673
        %1675 = vrot.lane.b32.xlu0 %v1638, 8
        %v1676 = vpop.permute.xlu0 %1675
        %1677 = vrot.lane.b32.xlu0 %v1639, 8
        %v1678 = vpop.permute.xlu0 %1677
        %1679 = vrot.lane.b32.xlu0 %v1640, 8
        %v1680 = vpop.permute.xlu0 %1679
        %1681 = vrot.lane.b32.xlu0 %v1641, 8
        %v1682 = vpop.permute.xlu0 %1681
        %1683 = vrot.lane.b32.xlu0 %v1642, 8
        %v1684 = vpop.permute.xlu0 %1683
        %1685 = vrot.lane.b32.xlu0 %v1643, 8
        %v1686 = vpop.permute.xlu0 %1685
        %1687 = vrot.lane.b32.xlu0 %v1644, 8
        %v1688 = vpop.permute.xlu0 %1687
        %1689 = vrot.lane.b32.xlu0 %v1645, 8
        %v1690 = vpop.permute.xlu0 %1689
        %1691 = vrot.lane.b32.xlu0 %v1646, 8
        %v1692 = vpop.permute.xlu0 %1691
        %1693 = vrot.lane.b32.xlu0 %v1647, 8
        %v1694 = vpop.permute.xlu0 %1693
        %1695 = vrot.lane.b32.xlu0 %v1648, 8
        %v1696 = vpop.permute.xlu0 %1695
        %v1713 = vsub.f32 %v1617, %v1666
        %v1714 = vsub.f32 %v1618, %v1668
        %v1715 = vsub.f32 %v1619, %v1670
        %v1716 = vsub.f32 %v1620, %v1672
        %v1717 = vsub.f32 %v1621, %v1674
        %v1718 = vsub.f32 %v1622, %v1676
        %v1719 = vsub.f32 %v1623, %v1678
        %v1720 = vsub.f32 %v1624, %v1680
        %v1721 = vsub.f32 %v1625, %v1682
        %v1722 = vsub.f32 %v1626, %v1684
        %v1723 = vsub.f32 %v1627, %v1686
        %v1724 = vsub.f32 %v1628, %v1688
        %v1725 = vsub.f32 %v1629, %v1690
        %v1726 = vsub.f32 %v1630, %v1692
        %v1727 = vsub.f32 %v1631, %v1694
        %v1728 = vsub.f32 %v1632, %v1696
        %v1729 = vsub.f32 %v1713, %v1003
        %v1730 = vsub.f32 %v1714, %v1004
        %v1731 = vsub.f32 %v1715, %v1005
        %v1732 = vsub.f32 %v1716, %v1006
        %v1733 = vsub.f32 %v1717, %v1007
        %v1734 = vsub.f32 %v1718, %v1008
        %v1735 = vsub.f32 %v1719, %v1009
        %v1736 = vsub.f32 %v1720, %v1010
        %v1737 = vsub.f32 %v1721, %v1011
        %v1738 = vsub.f32 %v1722, %v1012
        %v1739 = vsub.f32 %v1723, %v1013
        %v1740 = vsub.f32 %v1724, %v1014
        %v1741 = vsub.f32 %v1725, %v1015
        %v1742 = vsub.f32 %v1726, %v1016
        %v1743 = vsub.f32 %v1727, %v1017
        %v1744 = vsub.f32 %v1728, %v1018
        %1761 = vrot.lane.b32.xlu0 %v1729, 120
        %v1762 = vpop.permute.xlu0 %1761
        %1763 = vrot.lane.b32.xlu0 %v1730, 120
        %v1764 = vpop.permute.xlu0 %1763
        %1765 = vrot.lane.b32.xlu0 %v1731, 120
        %v1766 = vpop.permute.xlu0 %1765
        %1767 = vrot.lane.b32.xlu0 %v1732, 120
        %v1768 = vpop.permute.xlu0 %1767
        %1769 = vrot.lane.b32.xlu0 %v1733, 120
        %v1770 = vpop.permute.xlu0 %1769
        %1771 = vrot.lane.b32.xlu0 %v1734, 120
        %v1772 = vpop.permute.xlu0 %1771
        %1773 = vrot.lane.b32.xlu0 %v1735, 120
        %v1774 = vpop.permute.xlu0 %1773
        %1775 = vrot.lane.b32.xlu0 %v1736, 120
        %v1776 = vpop.permute.xlu0 %1775
        %1777 = vrot.lane.b32.xlu0 %v1737, 120
        %v1778 = vpop.permute.xlu0 %1777
        %1779 = vrot.lane.b32.xlu0 %v1738, 120
        %v1780 = vpop.permute.xlu0 %1779
        %1781 = vrot.lane.b32.xlu0 %v1739, 120
        %v1782 = vpop.permute.xlu0 %1781
        %1783 = vrot.lane.b32.xlu0 %v1740, 120
        %v1784 = vpop.permute.xlu0 %1783
        %1785 = vrot.lane.b32.xlu0 %v1741, 120
        %v1786 = vpop.permute.xlu0 %1785
        %1787 = vrot.lane.b32.xlu0 %v1742, 120
        %v1788 = vpop.permute.xlu0 %1787
        %1789 = vrot.lane.b32.xlu0 %v1743, 120
        %v1790 = vpop.permute.xlu0 %1789
        %1791 = vrot.lane.b32.xlu0 %v1744, 120
        %v1792 = vpop.permute.xlu0 %1791
        %v1809 = vsel %vm1163, %v1762, 0.0
        %1810 = vadd.xlane.f32.xlu0 %v1809
        %v1811 = vpop.xlane.xlu0 %1810
        %v1812 = vsel %vm1163, %v1764, 0.0
        %1813 = vadd.xlane.f32.xlu0 %v1812
        %v1814 = vpop.xlane.xlu0 %1813
        %v1815 = vsel %vm1163, %v1766, 0.0
        %1816 = vadd.xlane.f32.xlu0 %v1815
        %v1817 = vpop.xlane.xlu0 %1816
        %v1818 = vsel %vm1163, %v1768, 0.0
        %1819 = vadd.xlane.f32.xlu0 %v1818
        %v1820 = vpop.xlane.xlu0 %1819
        %v1821 = vsel %vm1163, %v1770, 0.0
        %1822 = vadd.xlane.f32.xlu0 %v1821
        %v1823 = vpop.xlane.xlu0 %1822
        %v1824 = vsel %vm1163, %v1772, 0.0
        %1825 = vadd.xlane.f32.xlu0 %v1824
        %v1826 = vpop.xlane.xlu0 %1825
        %v1827 = vsel %vm1163, %v1774, 0.0
        %1828 = vadd.xlane.f32.xlu0 %v1827
        %v1829 = vpop.xlane.xlu0 %1828
        %v1830 = vsel %vm1163, %v1776, 0.0
        %1831 = vadd.xlane.f32.xlu0 %v1830
        %v1832 = vpop.xlane.xlu0 %1831
        %v1833 = vsel %vm1163, %v1778, 0.0
        %1834 = vadd.xlane.f32.xlu0 %v1833
        %v1835 = vpop.xlane.xlu0 %1834
        %v1836 = vsel %vm1163, %v1780, 0.0
        %1837 = vadd.xlane.f32.xlu0 %v1836
        %v1838 = vpop.xlane.xlu0 %1837
        %v1839 = vsel %vm1163, %v1782, 0.0
        %1840 = vadd.xlane.f32.xlu0 %v1839
        %v1841 = vpop.xlane.xlu0 %1840
        %v1842 = vsel %vm1163, %v1784, 0.0
        %1843 = vadd.xlane.f32.xlu0 %v1842
        %v1844 = vpop.xlane.xlu0 %1843
        %v1845 = vsel %vm1163, %v1786, 0.0
        %1846 = vadd.xlane.f32.xlu0 %v1845
        %v1847 = vpop.xlane.xlu0 %1846
        %v1848 = vsel %vm1163, %v1788, 0.0
        %1849 = vadd.xlane.f32.xlu0 %v1848
        %v1850 = vpop.xlane.xlu0 %1849
        %v1851 = vsel %vm1163, %v1790, 0.0
        %1852 = vadd.xlane.f32.xlu0 %v1851
        %v1853 = vpop.xlane.xlu0 %1852
        %v1854 = vsel %vm1163, %v1792, 0.0
        %1855 = vadd.xlane.f32.xlu0 %v1854
        %v1856 = vpop.xlane.xlu0 %1855
        %v1857 = vmul.f32 %v1811, -0.5
        %v1858 = vmul.f32 %v1814, -0.5
        %v1859 = vmul.f32 %v1817, -0.5
        %v1860 = vmul.f32 %v1820, -0.5
        %v1861 = vmul.f32 %v1823, -0.5
        %v1862 = vmul.f32 %v1826, -0.5
        %v1863 = vmul.f32 %v1829, -0.5
        %v1864 = vmul.f32 %v1832, -0.5
        %v1865 = vmul.f32 %v1835, -0.5
        %v1866 = vmul.f32 %v1838, -0.5
        %v1867 = vmul.f32 %v1841, -0.5
        %v1868 = vmul.f32 %v1844, -0.5
        %v1869 = vmul.f32 %v1847, -0.5
        %v1870 = vmul.f32 %v1850, -0.5
        %v1871 = vmul.f32 %v1853, -0.5
        %v1872 = vmul.f32 %v1856, -0.5
        %v1873 = vmul.f32 %v1601, %v1601
        %v1874 = vmul.f32 %v1602, %v1602
        %v1875 = vmul.f32 %v1603, %v1603
        %v1876 = vmul.f32 %v1604, %v1604
        %v1877 = vmul.f32 %v1605, %v1605
        %v1878 = vmul.f32 %v1606, %v1606
        %v1879 = vmul.f32 %v1607, %v1607
        %v1880 = vmul.f32 %v1608, %v1608
        %v1881 = vmul.f32 %v1609, %v1609
        %v1882 = vmul.f32 %v1610, %v1610
        %v1883 = vmul.f32 %v1611, %v1611
        %v1884 = vmul.f32 %v1612, %v1612
        %v1885 = vmul.f32 %v1613, %v1613
        %v1886 = vmul.f32 %v1614, %v1614
        %v1887 = vmul.f32 %v1615, %v1615
        %v1888 = vmul.f32 %v1616, %v1616
        %v1889 = vsel %vm664, %v1873, 0.0
        %1890 = vadd.xlane.f32.xlu0 %v1889
        %v1891 = vpop.xlane.xlu0 %1890
        %v1892 = vsel %vm664, %v1874, 0.0
        %1893 = vadd.xlane.f32.xlu0 %v1892
        %v1894 = vpop.xlane.xlu0 %1893
        %v1895 = vsel %vm664, %v1875, 0.0
        %1896 = vadd.xlane.f32.xlu0 %v1895
        %v1897 = vpop.xlane.xlu0 %1896
        %v1898 = vsel %vm664, %v1876, 0.0
        %1899 = vadd.xlane.f32.xlu0 %v1898
        %v1900 = vpop.xlane.xlu0 %1899
        %v1901 = vsel %vm664, %v1877, 0.0
        %1902 = vadd.xlane.f32.xlu0 %v1901
        %v1903 = vpop.xlane.xlu0 %1902
        %v1904 = vsel %vm664, %v1878, 0.0
        %1905 = vadd.xlane.f32.xlu0 %v1904
        %v1906 = vpop.xlane.xlu0 %1905
        %v1907 = vsel %vm664, %v1879, 0.0
        %1908 = vadd.xlane.f32.xlu0 %v1907
        %v1909 = vpop.xlane.xlu0 %1908
        %v1910 = vsel %vm664, %v1880, 0.0
        %1911 = vadd.xlane.f32.xlu0 %v1910
        %v1912 = vpop.xlane.xlu0 %1911
        %v1913 = vsel %vm664, %v1881, 0.0
        %1914 = vadd.xlane.f32.xlu0 %v1913
        %v1915 = vpop.xlane.xlu0 %1914
        %v1916 = vsel %vm664, %v1882, 0.0
        %1917 = vadd.xlane.f32.xlu0 %v1916
        %v1918 = vpop.xlane.xlu0 %1917
        %v1919 = vsel %vm664, %v1883, 0.0
        %1920 = vadd.xlane.f32.xlu0 %v1919
        %v1921 = vpop.xlane.xlu0 %1920
        %v1922 = vsel %vm664, %v1884, 0.0
        %1923 = vadd.xlane.f32.xlu0 %v1922
        %v1924 = vpop.xlane.xlu0 %1923
        %v1925 = vsel %vm664, %v1885, 0.0
        %1926 = vadd.xlane.f32.xlu0 %v1925
        %v1927 = vpop.xlane.xlu0 %1926
        %v1928 = vsel %vm664, %v1886, 0.0
        %1929 = vadd.xlane.f32.xlu0 %v1928
        %v1930 = vpop.xlane.xlu0 %1929
        %v1931 = vsel %vm664, %v1887, 0.0
        %1932 = vadd.xlane.f32.xlu0 %v1931
        %v1933 = vpop.xlane.xlu0 %1932
        %v1934 = vsel %vm664, %v1888, 0.0
        %1935 = vadd.xlane.f32.xlu0 %v1934
        %v1936 = vpop.xlane.xlu0 %1935
        %v1953 = vlaneseq
        %v1954 = vand.u32 %v1953, 127
        %v1955 = vlaneseq
        %v1956 = vshrl.u32 %v1955, 7
        %v1957 = vsub.s32 %v1954, %v1956
        %v1958 = vrot.slane %v1857, %v1957
        %v1959 = vadd.s32 %v1954, 4294967288
        %v1960 = vlaneseq
        %v1961 = vshrl.u32 %v1960, 7
        %v1962 = vsub.s32 %v1959, %v1961
        %v1963 = vrot.slane %v1858, %v1962
        %vm1964 = vcmask 130112
        %v1965 = vsel %vm1964, %v1963, %v1958
        %v1966 = vadd.s32 %v1954, 4294967280
        %v1967 = vlaneseq
        %v1968 = vshrl.u32 %v1967, 7
        %v1969 = vsub.s32 %v1966, %v1968
        %v1970 = vrot.slane %v1859, %v1969
        %vm1971 = vcmask 195712
        %v1972 = vsel %vm1971, %v1970, %v1965
        %v1973 = vadd.s32 %v1954, 4294967272
        %v1974 = vlaneseq
        %v1975 = vshrl.u32 %v1974, 7
        %v1976 = vsub.s32 %v1973, %v1975
        %v1977 = vrot.slane %v1860, %v1976
        %vm1978 = vcmask 261312
        %v1979 = vsel %vm1978, %v1977, %v1972
        %v1980 = vadd.s32 %v1954, 4294967264
        %v1981 = vlaneseq
        %v1982 = vshrl.u32 %v1981, 7
        %v1983 = vsub.s32 %v1980, %v1982
        %v1984 = vrot.slane %v1861, %v1983
        %vm1985 = vcmask 326912
        %v1986 = vsel %vm1985, %v1984, %v1979
        %v1987 = vadd.s32 %v1954, 4294967256
        %v1988 = vlaneseq
        %v1989 = vshrl.u32 %v1988, 7
        %v1990 = vsub.s32 %v1987, %v1989
        %v1991 = vrot.slane %v1862, %v1990
        %vm1992 = vcmask 392512
        %v1993 = vsel %vm1992, %v1991, %v1986
        %v1994 = vadd.s32 %v1954, 4294967248
        %v1995 = vlaneseq
        %v1996 = vshrl.u32 %v1995, 7
        %v1997 = vsub.s32 %v1994, %v1996
        %v1998 = vrot.slane %v1863, %v1997
        %vm1999 = vcmask 458112
        %v2000 = vsel %vm1999, %v1998, %v1993
        %v2001 = vadd.s32 %v1954, 4294967240
        %v2002 = vlaneseq
        %v2003 = vshrl.u32 %v2002, 7
        %v2004 = vsub.s32 %v2001, %v2003
        %v2005 = vrot.slane %v1864, %v2004
        %vm2006 = vcmask 523712
        %v2007 = vsel %vm2006, %v2005, %v2000
        %v2008 = vadd.s32 %v1954, 4294967232
        %v2009 = vlaneseq
        %v2010 = vshrl.u32 %v2009, 7
        %v2011 = vsub.s32 %v2008, %v2010
        %v2012 = vrot.slane %v1865, %v2011
        %vm2013 = vcmask 589312
        %v2014 = vsel %vm2013, %v2012, %v2007
        %v2015 = vadd.s32 %v1954, 4294967224
        %v2016 = vlaneseq
        %v2017 = vshrl.u32 %v2016, 7
        %v2018 = vsub.s32 %v2015, %v2017
        %v2019 = vrot.slane %v1866, %v2018
        %vm2020 = vcmask 654912
        %v2021 = vsel %vm2020, %v2019, %v2014
        %v2022 = vadd.s32 %v1954, 4294967216
        %v2023 = vlaneseq
        %v2024 = vshrl.u32 %v2023, 7
        %v2025 = vsub.s32 %v2022, %v2024
        %v2026 = vrot.slane %v1867, %v2025
        %vm2027 = vcmask 720512
        %v2028 = vsel %vm2027, %v2026, %v2021
        %v2029 = vadd.s32 %v1954, 4294967208
        %v2030 = vlaneseq
        %v2031 = vshrl.u32 %v2030, 7
        %v2032 = vsub.s32 %v2029, %v2031
        %v2033 = vrot.slane %v1868, %v2032
        %vm2034 = vcmask 786112
        %v2035 = vsel %vm2034, %v2033, %v2028
        %v2036 = vadd.s32 %v1954, 4294967200
        %v2037 = vlaneseq
        %v2038 = vshrl.u32 %v2037, 7
        %v2039 = vsub.s32 %v2036, %v2038
        %v2040 = vrot.slane %v1869, %v2039
        %vm2041 = vcmask 851712
        %v2042 = vsel %vm2041, %v2040, %v2035
        %v2043 = vadd.s32 %v1954, 4294967192
        %v2044 = vlaneseq
        %v2045 = vshrl.u32 %v2044, 7
        %v2046 = vsub.s32 %v2043, %v2045
        %v2047 = vrot.slane %v1870, %v2046
        %vm2048 = vcmask 917312
        %v2049 = vsel %vm2048, %v2047, %v2042
        %v2050 = vadd.s32 %v1954, 4294967184
        %v2051 = vlaneseq
        %v2052 = vshrl.u32 %v2051, 7
        %v2053 = vsub.s32 %v2050, %v2052
        %v2054 = vrot.slane %v1871, %v2053
        %vm2055 = vcmask 982912
        %v2056 = vsel %vm2055, %v2054, %v2049
        %v2057 = vadd.s32 %v1954, 4294967176
        %v2058 = vlaneseq
        %v2059 = vshrl.u32 %v2058, 7
        %v2060 = vsub.s32 %v2057, %v2059
        %v2061 = vrot.slane %v1872, %v2060
        %vm2062 = vcmask 1048512
        %v2063 = vsel %vm2062, %v2061, %v2056
        %2065 = vst [vmem:[%s549] sm:$0x1] %v2063
        %v2082 = vlaneseq
        %v2083 = vshrl.u32 %v2082, 7
        %v2084 = vsub.s32 %v1954, %v2083
        %v2085 = vrot.slane %v1891, %v2084
        %v2086 = vlaneseq
        %v2087 = vshrl.u32 %v2086, 7
        %v2088 = vsub.s32 %v1959, %v2087
        %v2089 = vrot.slane %v1894, %v2088
        %v2090 = vsel %vm1964, %v2089, %v2085
        %v2091 = vlaneseq
        %v2092 = vshrl.u32 %v2091, 7
        %v2093 = vsub.s32 %v1966, %v2092
        %v2094 = vrot.slane %v1897, %v2093
        %v2095 = vsel %vm1971, %v2094, %v2090
        %v2096 = vlaneseq
        %v2097 = vshrl.u32 %v2096, 7
        %v2098 = vsub.s32 %v1973, %v2097
        %v2099 = vrot.slane %v1900, %v2098
        %v2100 = vsel %vm1978, %v2099, %v2095
        %v2101 = vlaneseq
        %v2102 = vshrl.u32 %v2101, 7
        %v2103 = vsub.s32 %v1980, %v2102
        %v2104 = vrot.slane %v1903, %v2103
        %v2105 = vsel %vm1985, %v2104, %v2100
        %v2106 = vlaneseq
        %v2107 = vshrl.u32 %v2106, 7
        %v2108 = vsub.s32 %v1987, %v2107
        %v2109 = vrot.slane %v1906, %v2108
        %v2110 = vsel %vm1992, %v2109, %v2105
        %v2111 = vlaneseq
        %v2112 = vshrl.u32 %v2111, 7
        %v2113 = vsub.s32 %v1994, %v2112
        %v2114 = vrot.slane %v1909, %v2113
        %v2115 = vsel %vm1999, %v2114, %v2110
        %v2116 = vlaneseq
        %v2117 = vshrl.u32 %v2116, 7
        %v2118 = vsub.s32 %v2001, %v2117
        %v2119 = vrot.slane %v1912, %v2118
        %v2120 = vsel %vm2006, %v2119, %v2115
        %v2121 = vlaneseq
        %v2122 = vshrl.u32 %v2121, 7
        %v2123 = vsub.s32 %v2008, %v2122
        %v2124 = vrot.slane %v1915, %v2123
        %v2125 = vsel %vm2013, %v2124, %v2120
        %v2126 = vlaneseq
        %v2127 = vshrl.u32 %v2126, 7
        %v2128 = vsub.s32 %v2015, %v2127
        %v2129 = vrot.slane %v1918, %v2128
        %v2130 = vsel %vm2020, %v2129, %v2125
        %v2131 = vlaneseq
        %v2132 = vshrl.u32 %v2131, 7
        %v2133 = vsub.s32 %v2022, %v2132
        %v2134 = vrot.slane %v1921, %v2133
        %v2135 = vsel %vm2027, %v2134, %v2130
        %v2136 = vlaneseq
        %v2137 = vshrl.u32 %v2136, 7
        %v2138 = vsub.s32 %v2029, %v2137
        %v2139 = vrot.slane %v1924, %v2138
        %v2140 = vsel %vm2034, %v2139, %v2135
        %v2141 = vlaneseq
        %v2142 = vshrl.u32 %v2141, 7
        %v2143 = vsub.s32 %v2036, %v2142
        %v2144 = vrot.slane %v1927, %v2143
        %v2145 = vsel %vm2041, %v2144, %v2140
        %v2146 = vlaneseq
        %v2147 = vshrl.u32 %v2146, 7
        %v2148 = vsub.s32 %v2043, %v2147
        %v2149 = vrot.slane %v1930, %v2148
        %v2150 = vsel %vm2048, %v2149, %v2145
        %v2151 = vlaneseq
        %v2152 = vshrl.u32 %v2151, 7
        %v2153 = vsub.s32 %v2050, %v2152
        %v2154 = vrot.slane %v1933, %v2153
        %v2155 = vsel %vm2055, %v2154, %v2150
        %v2156 = vlaneseq
        %v2157 = vshrl.u32 %v2156, 7
        %v2158 = vsub.s32 %v2057, %v2157
        %v2159 = vrot.slane %v1936, %v2158
        %v2160 = vsel %vm2062, %v2159, %v2155
        %2162 = vst [vmem:[%s549 + $0x1] sm:$0x1] %v2160
        %s2163 = smul.u32 16, %s30
        %p2164 = scmp.lt.s32.totalorder %s2163, 31
        %s2165 = scalar_select %p2164, %s2163, 31
        %s2166 = smul.addr %s2165, 8
        %s2167 = scalar_lea.vmem %s11, %s2166
        %s2168 = smul.u32 16, %s30
        %p2169 = scmp.lt.s32.totalorder %s2168, 31
        %s2170 = scalar_select %p2169, %s2168, 31
        %s2171 = smul.addr %s2170, 8
        %s2172 = scalar_lea.vmem %s12, %s2171
        %s2173 = smul.u32 16, %s30
        %p2174 = scmp.lt.s32.totalorder %s2173, 31
        %s2175 = scalar_select %p2174, %s2173, 31
        %s2176 = smul.addr %s2175, 8
        %s2177 = scalar_lea.vmem %s13, %s2176
        %s2178 = smul.u32 16, %s30
        %p2179 = scmp.lt.s32.totalorder %s2178, 31
        %s2180 = scalar_select %p2179, %s2178, 31
        %s2181 = smul.addr %s2180, 8
        %s2182 = scalar_lea.vmem %s14, %s2181
        %s2183 = sand.u32 %s388, 1
        %s2184 = scalar_lea.sflag [#allocation3], %s2183
        %s2185 = sand.u32 %s388, 1
        %s2186 = smul.addr %s2185, 2
        %s2187 = scalar_lea.vmem [#allocation2], %s2186
        // Predicated region
        $region65: #{tpu_custom_call.1} parent=63 // pred_check
          %p2188 = pneg %p294
        $region66: #{tpu_custom_call.1} parent=63 // pred_check_branch
          %2190 = sbr.rel (%p2188) target = $region68
        $region67: #{tpu_custom_call.1} parent=63 // pred_region
          %s2191 = smul.u32 16, %s30
        $region68: #{tpu_custom_call.1} parent=63 // pred_fallthru
          _
        // Predicated region
        $region69: #{tpu_custom_call.1} parent=63 // pred_check
          %p2192 = pneg %p320
        $region70: #{tpu_custom_call.1} parent=63 // pred_check_branch
          %2194 = sbr.rel (%p2192) target = $region72
        $region71: #{tpu_custom_call.1} parent=63 // pred_region
          %s2195 = smul.u32 16, %s30
        $region72: #{tpu_custom_call.1} parent=63 // pred_fallthru
          _
        // Predicated region
        $region73: #{tpu_custom_call.1} parent=63 // pred_check
          %p2196 = pneg %p346
        $region74: #{tpu_custom_call.1} parent=63 // pred_check_branch
          %2198 = sbr.rel (%p2196) target = $region76
        $region75: #{tpu_custom_call.1} parent=63 // pred_region
          %s2199 = smul.u32 16, %s30
        $region76: #{tpu_custom_call.1} parent=63 // pred_fallthru
          _
        // Predicated region
        $region77: #{tpu_custom_call.1} parent=63 // pred_check
          %p2200 = pneg %p372
        $region78: #{tpu_custom_call.1} parent=63 // pred_check_branch
          %2202 = sbr.rel (%p2200) target = $region80
        $region79: #{tpu_custom_call.1} parent=63 // pred_region
          %s2203 = smul.u32 16, %s30
        $region80: #{tpu_custom_call.1} parent=63 // pred_fallthru
          _
        // Predicated region
        $region81: #{tpu_custom_call.1} parent=63 // pred_check
          %p2204 = pneg %p398
        $region82: #{tpu_custom_call.1} parent=63 // pred_check_branch
          %2206 = sbr.rel (%p2204) target = $region84
        $region83: #{tpu_custom_call.1} parent=63 // pred_region
          %s2208 = ssub.s32 32, 32
          %2209 = vsyncadd %s2184, %s2208
          %s2210 = smul.addr %s30, 32
          %s2211 = scalar_lea.hbm %s15, %s2210
          %s2213 = sshll.u32 %s2187, 4
          %s2214 = int_to_ptr.vmem [resolvable:$true] %s2213
          %2216 = dma.vmem_to_hbm [thread:$0]  %s2214, 32, %s2211, %s2184
        $region84: #{tpu_custom_call.1} parent=63 // pred_fallthru
          _
      $region64: #{tpu_custom_call.1} parent=5 // pred_fallthru
        _
      %p2217 = scmp.le.s32.totalorder 2, %s25
      // Predicated region
      $region85: #{tpu_custom_call.1} parent=5 // pred_check
        %p2218 = pneg %p2217
      $region86: #{tpu_custom_call.1} parent=5 // pred_check_branch
        %2220 = sbr.rel (%p2218) target = $region88
      $region87: #{tpu_custom_call.1} parent=5 // pred_region
        %s2221 = ssub.s32 %s25, 2
        // Predicated region
        $region89: #{tpu_custom_call.1} parent=87 // pred_check
          %p2222 = pneg %p300
        $region90: #{tpu_custom_call.1} parent=87 // pred_check_branch
          %2224 = sbr.rel (%p2222) target = $region92
        $region91: #{tpu_custom_call.1} parent=87 // pred_region
          %s2225 = smul.u32 16, %s31
          %p2226 = scmp.lt.s32.totalorder %s2225, 31
          %s2227 = scalar_select %p2226, %s2225, 31
          %s2228 = smul.addr %s2227, 8
          %s2229 = scalar_lea.vmem %s11, %s2228
        $region92: #{tpu_custom_call.1} parent=87 // pred_fallthru
          _
        // Predicated region
        $region93: #{tpu_custom_call.1} parent=87 // pred_check
          %p2230 = pneg %p326
        $region94: #{tpu_custom_call.1} parent=87 // pred_check_branch
          %2232 = sbr.rel (%p2230) target = $region96
        $region95: #{tpu_custom_call.1} parent=87 // pred_region
          %s2233 = smul.u32 16, %s31
          %p2234 = scmp.lt.s32.totalorder %s2233, 31
          %s2235 = scalar_select %p2234, %s2233, 31
          %s2236 = smul.addr %s2235, 8
          %s2237 = scalar_lea.vmem %s12, %s2236
        $region96: #{tpu_custom_call.1} parent=87 // pred_fallthru
          _
        // Predicated region
        $region97: #{tpu_custom_call.1} parent=87 // pred_check
          %p2238 = pneg %p352
        $region98: #{tpu_custom_call.1} parent=87 // pred_check_branch
          %2240 = sbr.rel (%p2238) target = $region100
        $region99: #{tpu_custom_call.1} parent=87 // pred_region
          %s2241 = smul.u32 16, %s31
          %p2242 = scmp.lt.s32.totalorder %s2241, 31
          %s2243 = scalar_select %p2242, %s2241, 31
          %s2244 = smul.addr %s2243, 8
          %s2245 = scalar_lea.vmem %s13, %s2244
        $region100: #{tpu_custom_call.1} parent=87 // pred_fallthru
          _
        // Predicated region
        $region101: #{tpu_custom_call.1} parent=87 // pred_check
          %p2246 = pneg %p378
        $region102: #{tpu_custom_call.1} parent=87 // pred_check_branch
          %2248 = sbr.rel (%p2246) target = $region104
        $region103: #{tpu_custom_call.1} parent=87 // pred_region
          %s2249 = smul.u32 16, %s31
          %p2250 = scmp.lt.s32.totalorder %s2249, 31
          %s2251 = scalar_select %p2250, %s2249, 31
          %s2252 = smul.addr %s2251, 8
          %s2253 = scalar_lea.vmem %s14, %s2252
        $region104: #{tpu_custom_call.1} parent=87 // pred_fallthru
          _
        // Predicated region
        $region105: #{tpu_custom_call.1} parent=87 // pred_check
          %p2254 = pneg %p404
        $region106: #{tpu_custom_call.1} parent=87 // pred_check_branch
          %2256 = sbr.rel (%p2254) target = $region108
        $region107: #{tpu_custom_call.1} parent=87 // pred_region
          %s2257 = sand.u32 %s389, 1
          %s2258 = scalar_lea.sflag [#allocation3], %s2257
          %s2259 = sand.u32 %s389, 1
          %s2260 = smul.addr %s2259, 2
          %s2261 = scalar_lea.vmem [#allocation2], %s2260
          %2262 = dma.done %s2258, 32
        $region108: #{tpu_custom_call.1} parent=87 // pred_fallthru
          _
      $region88: #{tpu_custom_call.1} parent=5 // pred_fallthru
        _
    $region6: #{tpu_custom_call.1} parent=1 // loop_footer
      %s29 = sadd.s32 1, %s25
    $region7: #{tpu_custom_call.1} parent=1 // loop_footer_branch
      %24 = sbr.rel target = $region3
    $region8: #{tpu_custom_call.1} parent=1 // loop_exit
      _
    %2263 = vsyncpa [#allocation3], 1
    %s2264 = scalar_lea.sflag [#allocation3], 1
    %2265 = vsyncpa %s2264, 1

</llo_original>
